<compile_context>
chip_gen: v6e
topology: v6e:2x2x1
jax: 0.10.0
libtpu: 0.0.40
codegen_flags: <defaults>
</compile_context>

<pallas_src>
import functools

import jax
import jax.numpy as jnp
from jax.experimental import pallas as pl
from jax.experimental.pallas import tpu as pltpu


def mha_kernel(key_ref, value_ref, query_ref,
               wk_ref, bk_ref, wv_ref, bv_ref, wq_ref, bq_ref,
               wo_ref, bo_ref, gamma_ref, beta_ref,
               out_ref, attn_ref,
               *, num_heads, eps):
    H = num_heads
    L, D = query_ref.shape

    key = key_ref[...]
    value = value_ref[...]
    query = query_ref[...]            # also the residual

    # --- per-head QKV projections -------------------------------------------
    # Weights arrive pre-split per head as (H, D, d).  Broadcasting the (L, D)
    # activation along a new leading head axis is a cheap leading-dim broadcast
    # (no XLU cross-lane work); the projection is then one canonical
    # head-batched MXU matmul producing (H, L, d) directly.
    def project(x, w_ref, b_ref):
        xb = jnp.broadcast_to(x, (H, L, D))
        return jnp.einsum('hld,hde->hle', xb, w_ref[...],
                          preferred_element_type=jnp.float32) + b_ref[...]

    kh = project(key, wk_ref, bk_ref)        # (H, L, d)
    vh = project(value, wv_ref, bv_ref)      # (H, L, d)
    qh = project(query, wq_ref, bq_ref)      # (H, L, d); softmax scale folded into wq/bq

    # --- scaled dot-product attention, batched over heads --------------------
    scores = jnp.einsum('hld,hmd->hlm', qh, kh,
                        preferred_element_type=jnp.float32)       # (H, L, L)
    m = jnp.max(scores, axis=-1, keepdims=True)
    e = jnp.exp(scores - m)
    denom = jnp.sum(e, axis=-1, keepdims=True)
    inv = pl.reciprocal(denom, approx=True)        # EUP slot (cheap)
    inv = inv * (2.0 - denom * inv)                # one Newton step -> ~f32 accuracy
    attn = e * inv                                 # dropout(p=0)=identity, attn_mask=None

    # Single batched store of all heads' attention weights.
    # (Production: write bf16 / lane-dense -- this is the dominant HBM write.)
    attn_ref[...] = attn

    # --- context + output projection ------------------------------------------
    #   sum_h ctx_h @ Wo[h*d:(h+1)*d, :]  ==  context @ Wo   (no lane concat)
    ctx = jnp.einsum('hlm,hmd->hld', attn, vh,
                     preferred_element_type=jnp.float32)          # (H, L, d)
    out_h = jnp.einsum('hld,hde->hle', ctx, wo_ref[...],
                       preferred_element_type=jnp.float32)        # (H, L, D)
    out = jnp.sum(out_h, axis=0) + bo_ref[...]                    # (L, D)

    # --- residual + LayerNorm (f32) --------------------------------------------
    y = query + out
    mean = jnp.mean(y, axis=-1, keepdims=True)
    var = jnp.mean((y - mean) ** 2, axis=-1, keepdims=True)
    norm = (y - mean) * jax.lax.rsqrt(var + eps)
    out_ref[...] = norm * gamma_ref[...] + beta_ref[...]


def multi_head_attention(key, value, query, params, *, num_heads):
    """key/value/query: (L, D) f32.  Weights stored as (in, out).
    Returns (output (L, D), attention (H, L, L))."""
    L, D = query.shape
    H = num_heads
    d = D // H
    # PyTorch parity quirk: scale = (key.size(-1) // num_heads) ** (-0.5) with
    # INTEGER floor division -> only defined when dim_per_head >= num_heads.
    d_over_h = d // H
    if d_over_h <= 0:
        raise ValueError(
            f"dim_per_head ({d}) must be >= num_heads ({H}) for the PyTorch "
            "scale quirk (dim_per_head // num_heads) ** -0.5 to be defined.")
    scale = float(d_over_h ** (-0.5))
    eps = 1e-5

    wk, bk, wv, bv, wq, bq, wo, bo, gamma, beta = params

    # Fold the softmax scale into the Q projection at trace time (free for the kernel).
    wq = wq * scale
    bq = bq * scale

    # Pre-split projection weights per head (trace-time XLA reshapes, free):
    #   W (D, D) -> (H, D, d);  b (D,) -> (H, 1, d);  Wo (D, D) -> (H, d, D).
    def split_w_out(w):
        return jnp.transpose(w.reshape(D, H, d), (1, 0, 2))

    def split_b_out(b):
        return b.reshape(H, 1, d)

    wk_h, bk_h = split_w_out(wk), split_b_out(bk)
    wv_h, bv_h = split_w_out(wv), split_b_out(bv)
    wq_h, bq_h = split_w_out(wq), split_b_out(bq)
    wo_h = wo.reshape(H, d, D)
    bo2 = bo.reshape(1, D)
    gamma2 = gamma.reshape(1, D)
    beta2 = beta.reshape(1, D)

    kernel = functools.partial(mha_kernel, num_heads=H, eps=eps)

    vmem = pl.BlockSpec(memory_space=pltpu.MemorySpace.VMEM)
    out_shapes = (jax.ShapeDtypeStruct((L, D), jnp.float32),
                  jax.ShapeDtypeStruct((H, L, L), jnp.float32))

    # Gridless: at these sizes everything fits in one VMEM block and a grid
    # would only add per-step overhead (a TPU grid is a sequential loop).
    return pl.pallas_call(
        kernel,
        out_shape=out_shapes,
        in_specs=[vmem] * 13,
        out_specs=(vmem, vmem),
    )(key, value, query,
      wk_h, bk_h, wv_h, bv_h, wq_h, bq_h,
      wo_h, bo2, gamma2, beta2)


def reference(key, value, query, params, *, num_heads):
    """Pure-JAX mirror of the PyTorch v2 forward for verification."""
    wk, bk, wv, bv, wq, bq, wo, bo, gamma, beta = params
    L, D = query.shape
    d = D // num_heads
    scale = (d // num_heads) ** (-0.5)
    k = key @ wk + bk
    v = value @ wv + bv
    q = query @ wq + bq
    kh = k.reshape(L, num_heads, d).transpose(1, 0, 2)
    vh = v.reshape(L, num_heads, d).transpose(1, 0, 2)
    qh = q.reshape(L, num_heads, d).transpose(1, 0, 2)
    scores = jnp.einsum('hld,hmd->hlm', qh, kh) * scale
    attn = jax.nn.softmax(scores, axis=-1)
    ctx = jnp.einsum('hlm,hmd->hld', attn, vh).transpose(1, 0, 2).reshape(L, D)
    out = ctx @ wo + bo
    y = query + out
    mean = jnp.mean(y, axis=-1, keepdims=True)
    var = jnp.mean((y - mean) ** 2, axis=-1, keepdims=True)
    norm = (y - mean) / jnp.sqrt(var + 1e-5)
    return norm * gamma + beta, attn


if __name__ == "__main__":
    # Small shapes consistent with the module: seq L=8, model_dim=32, heads=4
    L, D, H = 8, 32, 4

    root = jax.random.PRNGKey(0)
    keys = jax.random.split(root, 11)

    key_in = jax.random.normal(keys[0], (L, D), jnp.float32)
    value_in = jax.random.normal(keys[1], (L, D), jnp.float32)
    query_in = jax.random.normal(keys[2], (L, D), jnp.float32)

    def lin(kw, kb):
        # deterministic synthetic weights, stored as (in, out)
        w = jax.random.normal(kw, (D, D), jnp.float32) * 0.1
        b = jax.random.normal(kb, (D,), jnp.float32) * 0.1
        return w, b

    wk, bk = lin(keys[3], keys[4])
    wv, bv = lin(keys[5], keys[6])
    wq, bq = lin(keys[7], keys[8])
    wo, bo = lin(keys[9], keys[10])
    gamma = jnp.ones((D,), jnp.float32)   # LayerNorm default affine
    beta = jnp.zeros((D,), jnp.float32)
    params = (wk, bk, wv, bv, wq, bq, wo, bo, gamma, beta)

    out, attn = multi_head_attention(key_in, value_in, query_in, params, num_heads=H)
    jax.block_until_ready((out, attn))

    ref_out, ref_attn = reference(key_in, value_in, query_in, params, num_heads=H)
    assert out.shape == (L, D) and attn.shape == (H, L, L)
    assert jnp.allclose(out, ref_out, atol=1e-3, rtol=1e-3), \
        float(jnp.max(jnp.abs(out - ref_out)))
    assert jnp.allclose(attn, ref_attn, atol=1e-4, rtol=1e-4), \
        float(jnp.max(jnp.abs(attn - ref_attn)))

    print("KERNEL_OK")
</pallas_src>

<mosaic_0001>
module attributes {stable_mosaic.version = 11 : i64} {
  func.func @mha_kernel(%arg0: memref<8x32xf32, #tpu.memory_space<vmem>>, %arg1: memref<8x32xf32, #tpu.memory_space<vmem>>, %arg2: memref<8x32xf32, #tpu.memory_space<vmem>>, %arg3: memref<4x32x8xf32, #tpu.memory_space<vmem>>, %arg4: memref<4x1x8xf32, #tpu.memory_space<vmem>>, %arg5: memref<4x32x8xf32, #tpu.memory_space<vmem>>, %arg6: memref<4x1x8xf32, #tpu.memory_space<vmem>>, %arg7: memref<4x32x8xf32, #tpu.memory_space<vmem>>, %arg8: memref<4x1x8xf32, #tpu.memory_space<vmem>>, %arg9: memref<4x8x32xf32, #tpu.memory_space<vmem>>, %arg10: memref<1x32xf32, #tpu.memory_space<vmem>>, %arg11: memref<1x32xf32, #tpu.memory_space<vmem>>, %arg12: memref<1x32xf32, #tpu.memory_space<vmem>>, %arg13: memref<8x32xf32, #tpu.memory_space<vmem>>, %arg14: memref<4x8x8xf32, #tpu.memory_space<vmem>>) attributes {dimension_semantics = [], scalar_prefetch = 0 : i64, scratch_operands = 0 : i64, tpu.core_type = #tpu.core_type<tc>} {
    %c0 = arith.constant 0 : index
    %c0_0 = arith.constant 0 : index
    %0 = vector.load %arg0[%c0, %c0_0] : memref<8x32xf32, #tpu.memory_space<vmem>>, vector<8x32xf32>
    %c0_1 = arith.constant 0 : index
    %c0_2 = arith.constant 0 : index
    %1 = vector.load %arg1[%c0_1, %c0_2] : memref<8x32xf32, #tpu.memory_space<vmem>>, vector<8x32xf32>
    %c0_3 = arith.constant 0 : index
    %c0_4 = arith.constant 0 : index
    %2 = vector.load %arg2[%c0_3, %c0_4] : memref<8x32xf32, #tpu.memory_space<vmem>>, vector<8x32xf32>
    %3 = vector.shape_cast %0 : vector<8x32xf32> to vector<1x8x32xf32>
    %4 = vector.broadcast %3 : vector<1x8x32xf32> to vector<4x8x32xf32>
    %c0_5 = arith.constant 0 : index
    %c0_6 = arith.constant 0 : index
    %c0_7 = arith.constant 0 : index
    %5 = vector.load %arg3[%c0_5, %c0_6, %c0_7] : memref<4x32x8xf32, #tpu.memory_space<vmem>>, vector<4x32x8xf32>
    "tpu.trace_start"() <{level = 10 : i32, message = "hld,hde->hle"}> : () -> ()
    %cst = arith.constant dense<0.000000e+00> : vector<4x8x8xf32>
    %6 = tpu.matmul %4, %5, %cst {dimension_numbers = #tpu.dot_dimension_numbers<[2], [1], [1], [2], [0, 0, 0, 1, 1, 2], [0], [0]>} : vector<4x8x32xf32>, vector<4x32x8xf32>, vector<4x8x8xf32> -> vector<4x8x8xf32>
    "tpu.trace_stop"() : () -> ()
    %c0_8 = arith.constant 0 : index
    %c0_9 = arith.constant 0 : index
    %c0_10 = arith.constant 0 : index
    %7 = vector.load %arg4[%c0_8, %c0_9, %c0_10] : memref<4x1x8xf32, #tpu.memory_space<vmem>>, vector<4x1x8xf32>
    %8 = vector.broadcast %7 : vector<4x1x8xf32> to vector<4x8x8xf32>
    %9 = arith.addf %6, %8 : vector<4x8x8xf32>
    %10 = vector.shape_cast %1 : vector<8x32xf32> to vector<1x8x32xf32>
    %11 = vector.broadcast %10 : vector<1x8x32xf32> to vector<4x8x32xf32>
    %c0_11 = arith.constant 0 : index
    %c0_12 = arith.constant 0 : index
    %c0_13 = arith.constant 0 : index
    %12 = vector.load %arg5[%c0_11, %c0_12, %c0_13] : memref<4x32x8xf32, #tpu.memory_space<vmem>>, vector<4x32x8xf32>
    "tpu.trace_start"() <{level = 10 : i32, message = "hld,hde->hle"}> : () -> ()
    %cst_14 = arith.constant dense<0.000000e+00> : vector<4x8x8xf32>
    %13 = tpu.matmul %11, %12, %cst_14 {dimension_numbers = #tpu.dot_dimension_numbers<[2], [1], [1], [2], [0, 0, 0, 1, 1, 2], [0], [0]>} : vector<4x8x32xf32>, vector<4x32x8xf32>, vector<4x8x8xf32> -> vector<4x8x8xf32>
    "tpu.trace_stop"() : () -> ()
    %c0_15 = arith.constant 0 : index
    %c0_16 = arith.constant 0 : index
    %c0_17 = arith.constant 0 : index
    %14 = vector.load %arg6[%c0_15, %c0_16, %c0_17] : memref<4x1x8xf32, #tpu.memory_space<vmem>>, vector<4x1x8xf32>
    %15 = vector.broadcast %14 : vector<4x1x8xf32> to vector<4x8x8xf32>
    %16 = arith.addf %13, %15 : vector<4x8x8xf32>
    %17 = vector.shape_cast %2 : vector<8x32xf32> to vector<1x8x32xf32>
    %18 = vector.broadcast %17 : vector<1x8x32xf32> to vector<4x8x32xf32>
    %c0_18 = arith.constant 0 : index
    %c0_19 = arith.constant 0 : index
    %c0_20 = arith.constant 0 : index
    %19 = vector.load %arg7[%c0_18, %c0_19, %c0_20] : memref<4x32x8xf32, #tpu.memory_space<vmem>>, vector<4x32x8xf32>
    "tpu.trace_start"() <{level = 10 : i32, message = "hld,hde->hle"}> : () -> ()
    %cst_21 = arith.constant dense<0.000000e+00> : vector<4x8x8xf32>
    %20 = tpu.matmul %18, %19, %cst_21 {dimension_numbers = #tpu.dot_dimension_numbers<[2], [1], [1], [2], [0, 0, 0, 1, 1, 2], [0], [0]>} : vector<4x8x32xf32>, vector<4x32x8xf32>, vector<4x8x8xf32> -> vector<4x8x8xf32>
    "tpu.trace_stop"() : () -> ()
    %c0_22 = arith.constant 0 : index
    %c0_23 = arith.constant 0 : index
    %c0_24 = arith.constant 0 : index
    %21 = vector.load %arg8[%c0_22, %c0_23, %c0_24] : memref<4x1x8xf32, #tpu.memory_space<vmem>>, vector<4x1x8xf32>
    %22 = vector.broadcast %21 : vector<4x1x8xf32> to vector<4x8x8xf32>
    %23 = arith.addf %20, %22 : vector<4x8x8xf32>
    "tpu.trace_start"() <{level = 10 : i32, message = "hld,hmd->hlm"}> : () -> ()
    %cst_25 = arith.constant dense<0.000000e+00> : vector<4x8x8xf32>
    %24 = tpu.matmul %23, %9, %cst_25 {dimension_numbers = #tpu.dot_dimension_numbers<[2], [2], [1], [1], [0, 0, 0, 1, 1, 1], [0], [0]>} : vector<4x8x8xf32>, vector<4x8x8xf32>, vector<4x8x8xf32> -> vector<4x8x8xf32>
    "tpu.trace_stop"() : () -> ()
    %cst_26 = arith.constant dense<0xFF800000> : vector<4x8xf32>
    %25 = vector.multi_reduction <maximumf>, %24, %cst_26 [2] : vector<4x8x8xf32> to vector<4x8xf32>
    %26 = vector.shape_cast %25 : vector<4x8xf32> to vector<4x8x1xf32>
    %27 = vector.broadcast %26 : vector<4x8x1xf32> to vector<4x8x8xf32>
    %28 = arith.subf %24, %27 : vector<4x8x8xf32>
    %29 = math.exp %28 : vector<4x8x8xf32>
    %cst_27 = arith.constant dense<0.000000e+00> : vector<4x8xf32>
    %30 = vector.multi_reduction <add>, %29, %cst_27 [2] : vector<4x8x8xf32> to vector<4x8xf32>
    %31 = vector.shape_cast %30 : vector<4x8xf32> to vector<4x8x1xf32>
    %32 = tpu.reciprocal %31 {approx = true} : vector<4x8x1xf32> -> vector<4x8x1xf32>
    %33 = arith.mulf %31, %32 : vector<4x8x1xf32>
    %cst_28 = arith.constant 2.000000e+00 : f32
    %34 = vector.broadcast %cst_28 : f32 to vector<4x8x1xf32>
    %35 = arith.subf %34, %33 : vector<4x8x1xf32>
    %36 = arith.mulf %32, %35 : vector<4x8x1xf32>
    %37 = vector.broadcast %36 : vector<4x8x1xf32> to vector<4x8x8xf32>
    %38 = arith.mulf %29, %37 : vector<4x8x8xf32>
    %c0_29 = arith.constant 0 : index
    %c0_30 = arith.constant 0 : index
    %c0_31 = arith.constant 0 : index
    %39 = vector.load %arg14[%c0_29, %c0_30, %c0_31] : memref<4x8x8xf32, #tpu.memory_space<vmem>>, vector<4x8x8xf32>
    tpu.vector_store %arg14[%c0_29, %c0_30, %c0_31], %38 {strides = array<i32>} : memref<4x8x8xf32, #tpu.memory_space<vmem>>, vector<4x8x8xf32>,
    "tpu.trace_start"() <{level = 10 : i32, message = "hlm,hmd->hld"}> : () -> ()
    %cst_32 = arith.constant dense<0.000000e+00> : vector<4x8x8xf32>
    %40 = tpu.matmul %38, %16, %cst_32 {dimension_numbers = #tpu.dot_dimension_numbers<[2], [1], [1], [2], [0, 0, 0, 1, 1, 2], [0], [0]>} : vector<4x8x8xf32>, vector<4x8x8xf32>, vector<4x8x8xf32> -> vector<4x8x8xf32>
    "tpu.trace_stop"() : () -> ()
    %c0_33 = arith.constant 0 : index
    %c0_34 = arith.constant 0 : index
    %c0_35 = arith.constant 0 : index
    %41 = vector.load %arg9[%c0_33, %c0_34, %c0_35] : memref<4x8x32xf32, #tpu.memory_space<vmem>>, vector<4x8x32xf32>
    "tpu.trace_start"() <{level = 10 : i32, message = "hld,hde->hle"}> : () -> ()
    %cst_36 = arith.constant dense<0.000000e+00> : vector<4x8x32xf32>
    %42 = tpu.matmul %40, %41, %cst_36 {dimension_numbers = #tpu.dot_dimension_numbers<[2], [1], [1], [2], [0, 0, 0, 1, 1, 2], [0], [0]>} : vector<4x8x8xf32>, vector<4x8x32xf32>, vector<4x8x32xf32> -> vector<4x8x32xf32>
    "tpu.trace_stop"() : () -> ()
    %cst_37 = arith.constant dense<0.000000e+00> : vector<8x32xf32>
    %43 = vector.multi_reduction <add>, %42, %cst_37 [0] : vector<4x8x32xf32> to vector<8x32xf32>
    %c0_38 = arith.constant 0 : index
    %c0_39 = arith.constant 0 : index
    %44 = vector.load %arg10[%c0_38, %c0_39] : memref<1x32xf32, #tpu.memory_space<vmem>>, vector<1x32xf32>
    %45 = vector.broadcast %44 : vector<1x32xf32> to vector<8x32xf32>
    %46 = arith.addf %43, %45 : vector<8x32xf32>
    %47 = arith.addf %2, %46 : vector<8x32xf32>
    %cst_40 = arith.constant dense<0.000000e+00> : vector<8xf32>
    %48 = vector.multi_reduction <add>, %47, %cst_40 [1] : vector<8x32xf32> to vector<8xf32>
    %49 = vector.shape_cast %48 : vector<8xf32> to vector<8x1xf32>
    %cst_41 = arith.constant 3.200000e+01 : f32
    %50 = vector.broadcast %cst_41 : f32 to vector<8x1xf32>
    %51 = arith.divf %49, %50 : vector<8x1xf32>
    %52 = vector.broadcast %51 : vector<8x1xf32> to vector<8x32xf32>
    %53 = arith.subf %47, %52 : vector<8x32xf32>
    %54 = arith.mulf %53, %53 : vector<8x32xf32>
    %cst_42 = arith.constant dense<0.000000e+00> : vector<8xf32>
    %55 = vector.multi_reduction <add>, %54, %cst_42 [1] : vector<8x32xf32> to vector<8xf32>
    %56 = vector.shape_cast %55 : vector<8xf32> to vector<8x1xf32>
    %cst_43 = arith.constant 3.200000e+01 : f32
    %57 = vector.broadcast %cst_43 : f32 to vector<8x1xf32>
    %58 = arith.divf %56, %57 : vector<8x1xf32>
    %59 = vector.broadcast %51 : vector<8x1xf32> to vector<8x32xf32>
    %60 = arith.subf %47, %59 : vector<8x32xf32>
    %cst_44 = arith.constant 9.99999974E-6 : f32
    %61 = vector.broadcast %cst_44 : f32 to vector<8x1xf32>
    %62 = arith.addf %58, %61 : vector<8x1xf32>
    %63 = math.rsqrt %62 : vector<8x1xf32>
    %64 = vector.broadcast %63 : vector<8x1xf32> to vector<8x32xf32>
    %65 = arith.mulf %60, %64 : vector<8x32xf32>
    %c0_45 = arith.constant 0 : index
    %c0_46 = arith.constant 0 : index
    %66 = vector.load %arg11[%c0_45, %c0_46] : memref<1x32xf32, #tpu.memory_space<vmem>>, vector<1x32xf32>
    %67 = vector.broadcast %66 : vector<1x32xf32> to vector<8x32xf32>
    %68 = arith.mulf %65, %67 : vector<8x32xf32>
    %c0_47 = arith.constant 0 : index
    %c0_48 = arith.constant 0 : index
    %69 = vector.load %arg12[%c0_47, %c0_48] : memref<1x32xf32, #tpu.memory_space<vmem>>, vector<1x32xf32>
    %70 = vector.broadcast %69 : vector<1x32xf32> to vector<8x32xf32>
    %71 = arith.addf %68, %70 : vector<8x32xf32>
    %c0_49 = arith.constant 0 : index
    %c0_50 = arith.constant 0 : index
    %72 = vector.load %arg13[%c0_49, %c0_50] : memref<8x32xf32, #tpu.memory_space<vmem>>, vector<8x32xf32>
    tpu.vector_store %arg13[%c0_49, %c0_50], %71 {strides = array<i32>} : memref<8x32xf32, #tpu.memory_space<vmem>>, vector<8x32xf32>,
    return
  }
}

</mosaic_0001>

<llo_original>
// kernel: tpu_custom_call.1
$region0: #{tpu_custom_call.1}
  #allocation0 [shape = 'u32[]', space=smem, size = 0x4, offset = 0x4, fixed_abs, tag = 'smem constant byte address 0x4 - core index']
  #allocation1 [shape = 'u32[144,128]{1,0:T(1,128)}', space=vmem, size = 0x12000, scoped, tag = 'internal scratch']
  %s0 = inlined_call_operand.vmem [shape: f32[8,32], index: 0, kind: input, shape index: {}]
  %s1 = inlined_call_operand.vmem [shape: f32[8,32], index: 1, kind: input, shape index: {}]
  %s2 = inlined_call_operand.vmem [shape: f32[8,32], index: 2, kind: input, shape index: {}]
  %s3 = inlined_call_operand.vmem [shape: f32[4,32,8], index: 3, kind: input, shape index: {}]
  %s4 = inlined_call_operand.vmem [shape: f32[4,1,8], index: 4, kind: input, shape index: {}]
  %s5 = inlined_call_operand.vmem [shape: f32[4,32,8], index: 5, kind: input, shape index: {}]
  %s6 = inlined_call_operand.vmem [shape: f32[4,1,8], index: 6, kind: input, shape index: {}]
  %s7 = inlined_call_operand.vmem [shape: f32[4,32,8], index: 7, kind: input, shape index: {}]
  %s8 = inlined_call_operand.vmem [shape: f32[4,1,8], index: 8, kind: input, shape index: {}]
  %s9 = inlined_call_operand.vmem [shape: f32[4,8,32], index: 9, kind: input, shape index: {}]
  %s10 = inlined_call_operand.vmem [shape: f32[1,32], index: 10, kind: input, shape index: {}]
  %s11 = inlined_call_operand.vmem [shape: f32[1,32], index: 11, kind: input, shape index: {}]
  %s12 = inlined_call_operand.vmem [shape: f32[1,32], index: 12, kind: input, shape index: {}]
  %s13 = inlined_call_operand.hbm [shape: f32[8,32], index: 13, kind: output, shape index: {0}]
  %s14 = inlined_call_operand.hbm [shape: f32[4,8,8], index: 14, kind: output, shape index: {1}]
  %15 = xla_tuple %s13, %s14
  %s16 = sld [smem:[#allocation0]]
  $region70: #{tpu_custom_call.1} parent=0
    _
  %s18 = ssub.s32 1, %s16
  %s19 = scalar_select 0, %s18, %s16
  $region1: #{tpu_custom_call.1} parent=0
    #allocation2 [shape = 'u8[4096]{0}', space=vmem, size = 0x1000, scoped, tag = 'output window, operand 0, single buffered']
    #allocation3 [shape = 's32[1]{0}', space=sflag, size = 0x4, scoped, tag = 'scoped memory for tpu_custom_call.1']
    #allocation4 [shape = 'u8[16384]{0}', space=vmem, size = 0x4000, scoped, tag = 'output window, operand 1, single buffered']
    #allocation5 [shape = 's32[1]{0}', space=sflag, size = 0x4, scoped, tag = 'scoped memory for tpu_custom_call.1']
    %20 = vsyncpa [#allocation3], 0
    %21 = vsyncpa [#allocation5], 0
    // Predicated region
    $region2: #{tpu_custom_call.1} parent=1 // pred_check
      _
    $region3: #{tpu_custom_call.1} parent=1 // pred_check_branch
      %23 = sbr.rel (0) target = $region5
    $region4: #{tpu_custom_call.1} parent=1 // pred_region
      _
    $region5: #{tpu_custom_call.1} parent=1 // pred_fallthru
      _
    // Predicated region
    $region6: #{tpu_custom_call.1} parent=1 // pred_check
      _
    $region7: #{tpu_custom_call.1} parent=1 // pred_check_branch
      %25 = sbr.rel (0) target = $region9
    $region8: #{tpu_custom_call.1} parent=1 // pred_region
      _
    $region9: #{tpu_custom_call.1} parent=1 // pred_fallthru
      _
    // Predicated region
    $region10: #{tpu_custom_call.1} parent=1 // pred_check
      _
    $region11: #{tpu_custom_call.1} parent=1 // pred_check_branch
      %27 = sbr.rel (0) target = $region13
    $region12: #{tpu_custom_call.1} parent=1 // pred_region
      _
    $region13: #{tpu_custom_call.1} parent=1 // pred_fallthru
      _
    // Predicated region
    $region14: #{tpu_custom_call.1} parent=1 // pred_check
      _
    $region15: #{tpu_custom_call.1} parent=1 // pred_check_branch
      %29 = sbr.rel (0) target = $region17
    $region16: #{tpu_custom_call.1} parent=1 // pred_region
      _
    $region17: #{tpu_custom_call.1} parent=1 // pred_fallthru
      _
    // Predicated region
    $region18: #{tpu_custom_call.1} parent=1 // pred_check
      _
    $region19: #{tpu_custom_call.1} parent=1 // pred_check_branch
      %31 = sbr.rel (0) target = $region21
    $region20: #{tpu_custom_call.1} parent=1 // pred_region
      _
    $region21: #{tpu_custom_call.1} parent=1 // pred_fallthru
      _
    // Predicated region
    $region22: #{tpu_custom_call.1} parent=1 // pred_check
      _
    $region23: #{tpu_custom_call.1} parent=1 // pred_check_branch
      %33 = sbr.rel (0) target = $region25
    $region24: #{tpu_custom_call.1} parent=1 // pred_region
      _
    $region25: #{tpu_custom_call.1} parent=1 // pred_fallthru
      _
    // Predicated region
    $region26: #{tpu_custom_call.1} parent=1 // pred_check
      _
    $region27: #{tpu_custom_call.1} parent=1 // pred_check_branch
      %35 = sbr.rel (0) target = $region29
    $region28: #{tpu_custom_call.1} parent=1 // pred_region
      _
    $region29: #{tpu_custom_call.1} parent=1 // pred_fallthru
      _
    // Predicated region
    $region30: #{tpu_custom_call.1} parent=1 // pred_check
      _
    $region31: #{tpu_custom_call.1} parent=1 // pred_check_branch
      %37 = sbr.rel (0) target = $region33
    $region32: #{tpu_custom_call.1} parent=1 // pred_region
      _
    $region33: #{tpu_custom_call.1} parent=1 // pred_fallthru
      _
    // Predicated region
    $region34: #{tpu_custom_call.1} parent=1 // pred_check
      _
    $region35: #{tpu_custom_call.1} parent=1 // pred_check_branch
      %39 = sbr.rel (0) target = $region37
    $region36: #{tpu_custom_call.1} parent=1 // pred_region
      _
    $region37: #{tpu_custom_call.1} parent=1 // pred_fallthru
      _
    // Predicated region
    $region38: #{tpu_custom_call.1} parent=1 // pred_check
      _
    $region39: #{tpu_custom_call.1} parent=1 // pred_check_branch
      %41 = sbr.rel (0) target = $region41
    $region40: #{tpu_custom_call.1} parent=1 // pred_region
      _
    $region41: #{tpu_custom_call.1} parent=1 // pred_fallthru
      _
    // Predicated region
    $region42: #{tpu_custom_call.1} parent=1 // pred_check
      _
    $region43: #{tpu_custom_call.1} parent=1 // pred_check_branch
      %43 = sbr.rel (0) target = $region45
    $region44: #{tpu_custom_call.1} parent=1 // pred_region
      _
    $region45: #{tpu_custom_call.1} parent=1 // pred_fallthru
      _
    // Predicated region
    $region46: #{tpu_custom_call.1} parent=1 // pred_check
      _
    $region47: #{tpu_custom_call.1} parent=1 // pred_check_branch
      %45 = sbr.rel (0) target = $region49
    $region48: #{tpu_custom_call.1} parent=1 // pred_region
      _
    $region49: #{tpu_custom_call.1} parent=1 // pred_fallthru
      _
    // Predicated region
    $region50: #{tpu_custom_call.1} parent=1 // pred_check
      _
    $region51: #{tpu_custom_call.1} parent=1 // pred_check_branch
      %47 = sbr.rel (0) target = $region53
    $region52: #{tpu_custom_call.1} parent=1 // pred_region
      _
    $region53: #{tpu_custom_call.1} parent=1 // pred_fallthru
      _
    %v48 = vld [vmem:[%s0] sm:$0xff]
    %v49 = vld [vmem:[%s1] sm:$0xff]
    %v50 = vld [vmem:[%s2] sm:$0xff]
    %v51 = vld [vmem:[%s3] sm:$0xff]
    %v52 = vld [vmem:[%s3 + $0x8] sm:$0xff]
    %v53 = vld [vmem:[%s3 + $0x10] sm:$0xff]
    %v54 = vld [vmem:[%s3 + $0x18] sm:$0xff]
    %v55 = vld [vmem:[%s3 + $0x20] sm:$0xff]
    %v56 = vld [vmem:[%s3 + $0x28] sm:$0xff]
    %v57 = vld [vmem:[%s3 + $0x30] sm:$0xff]
    %v58 = vld [vmem:[%s3 + $0x38] sm:$0xff]
    %v59 = vld [vmem:[%s3 + $0x40] sm:$0xff]
    %v60 = vld [vmem:[%s3 + $0x48] sm:$0xff]
    %v61 = vld [vmem:[%s3 + $0x50] sm:$0xff]
    %v62 = vld [vmem:[%s3 + $0x58] sm:$0xff]
    %v63 = vld [vmem:[%s3 + $0x60] sm:$0xff]
    %v64 = vld [vmem:[%s3 + $0x68] sm:$0xff]
    %v65 = vld [vmem:[%s3 + $0x70] sm:$0xff]
    %v66 = vld [vmem:[%s3 + $0x78] sm:$0xff]
    %v67 = vld [vmem:[%s4] sm:$0x1]
    %v68 = vld [vmem:[%s4 + $0x1] sm:$0x1]
    %v69 = vld [vmem:[%s4 + $0x2] sm:$0x1]
    %v70 = vld [vmem:[%s4 + $0x3] sm:$0x1]
    %v75 = vlaneseq
    %v76 = vshrl.u32 %v75, 7
    %v77 = vsub.s32 0, %v76
    %v78 = vrot.slane %v67, %v77
    %v79 = vlaneseq
    %v80 = vshrl.u32 %v79, 7
    %v81 = vsub.s32 0, %v80
    %v82 = vrot.slane %v68, %v81
    %v83 = vlaneseq
    %v84 = vshrl.u32 %v83, 7
    %v85 = vsub.s32 0, %v84
    %v86 = vrot.slane %v69, %v85
    %v87 = vlaneseq
    %v88 = vshrl.u32 %v87, 7
    %v89 = vsub.s32 0, %v88
    %v90 = vrot.slane %v70, %v89
    %vm95 = vcmask 261120
    %v97 = vsel %vm95, %v48, 0
    %99 = vmatprep.subr.mxu0 0.0
    %100 = vmatpush1.msra.mxu0 0.0
    %101 = vmatprep.subr.mxu0 0.0
    %102 = vmatpush1.msra.mxu0 0.0
    %103 = vmatprep.subr.mxu0 0.0
    %104 = vmatpush1.msra.mxu0 0.0
    %105 = vmatprep.subr.mxu0 0.0
    %106 = vmatpush1.msra.mxu0 0.0
    %107 = vmatprep.subr.mxu0 0.0
    %108 = vmatpush1.msra.mxu0 0.0
    %109 = vmatprep.subr.mxu0 0.0
    %110 = vmatpush1.msra.mxu0 0.0
    %111 = vmatprep.subr.mxu0 0.0
    %112 = vmatpush1.msra.mxu0 0.0
    %113 = vmatprep.subr.mxu0 0.0
    %114 = vmatpush1.msra.mxu0 0.0
    %115 = vmatprep.subr.mxu0 0.0
    %116 = vmatpush1.msra.mxu0 0.0
    %117 = vmatprep.subr.mxu0 0.0
    %118 = vmatpush1.msra.mxu0 0.0
    %119 = vmatprep.subr.mxu0 0.0
    %120 = vmatpush1.msra.mxu0 0.0
    %121 = vmatprep.subr.mxu0 0.0
    %122 = vmatpush1.msra.mxu0 0.0
    %123 = vmatprep.subr.mxu0 0.0
    %124 = vmatpush1.msra.mxu0 %v54
    %125 = vmatprep.subr.mxu0 0.0
    %126 = vmatpush1.msra.mxu0 %v53
    %127 = vmatprep.subr.mxu0 0.0
    %128 = vmatpush1.msra.mxu0 %v52
    %129 = vmatprep.subr.mxu0 0.0
    %130 = vmatpush1.msra.mxu0 %v51
    %131 = vmatprep.subr.mxu0 0.0
    %132 = vmatpush2.msra.mxu0 0.0
    %133 = vmatprep.subr.mxu0 0.0
    %134 = vmatpush2.msra.mxu0 0.0
    %135 = vmatprep.subr.mxu0 0.0
    %136 = vmatpush2.msra.mxu0 0.0
    %137 = vmatprep.subr.mxu0 0.0
    %138 = vmatpush2.msra.mxu0 0.0
    %139 = vmatprep.subr.mxu0 0.0
    %140 = vmatpush2.msra.mxu0 0.0
    %141 = vmatprep.subr.mxu0 0.0
    %142 = vmatpush2.msra.mxu0 0.0
    %143 = vmatprep.subr.mxu0 0.0
    %144 = vmatpush2.msra.mxu0 0.0
    %145 = vmatprep.subr.mxu0 0.0
    %146 = vmatpush2.msra.mxu0 0.0
    %147 = vmatprep.subr.mxu0 0.0
    %148 = vmatpush2.msra.mxu0 0.0
    %149 = vmatprep.subr.mxu0 0.0
    %150 = vmatpush2.msra.mxu0 0.0
    %151 = vmatprep.subr.mxu0 0.0
    %152 = vmatpush2.msra.mxu0 0.0
    %153 = vmatprep.subr.mxu0 0.0
    %154 = vmatpush2.msra.mxu0 0.0
    %155 = vmatprep.subr.mxu0 0.0
    %156 = vmatpush2.msra.mxu0 0.0
    %157 = vmatprep.subr.mxu0 0.0
    %158 = vmatpush2.msra.mxu0 0.0
    %159 = vmatprep.subr.mxu0 0.0
    %160 = vmatpush2.msra.mxu0 0.0
    %161 = vmatprep.subr.mxu0 0.0
    %162 = vmatpush2.msra.mxu0 0.0
    %163 = vmatprep.mubr.f32.mxu0 0.0
    %164 = vmatmul.mubr.f32.gmra.mxu0 %v97
    %v165 = vpop.f32.mrf.mxu0
    %v166 = vadd.f32 %v78, %v165
    %v167 = vpop.f32.mrf.mxu0
    %168 = vdwg.mxu0
    %169 = vmatprep.subr.mxu0 0.0
    %170 = vmatpush1.msra.mxu0 0.0
    %171 = vmatprep.subr.mxu0 0.0
    %172 = vmatpush1.msra.mxu0 0.0
    %173 = vmatprep.subr.mxu0 0.0
    %174 = vmatpush1.msra.mxu0 0.0
    %175 = vmatprep.subr.mxu0 0.0
    %176 = vmatpush1.msra.mxu0 0.0
    %177 = vmatprep.subr.mxu0 0.0
    %178 = vmatpush1.msra.mxu0 0.0
    %179 = vmatprep.subr.mxu0 0.0
    %180 = vmatpush1.msra.mxu0 0.0
    %181 = vmatprep.subr.mxu0 0.0
    %182 = vmatpush1.msra.mxu0 0.0
    %183 = vmatprep.subr.mxu0 0.0
    %184 = vmatpush1.msra.mxu0 0.0
    %185 = vmatprep.subr.mxu0 0.0
    %186 = vmatpush1.msra.mxu0 0.0
    %187 = vmatprep.subr.mxu0 0.0
    %188 = vmatpush1.msra.mxu0 0.0
    %189 = vmatprep.subr.mxu0 0.0
    %190 = vmatpush1.msra.mxu0 0.0
    %191 = vmatprep.subr.mxu0 0.0
    %192 = vmatpush1.msra.mxu0 0.0
    %193 = vmatprep.subr.mxu0 0.0
    %194 = vmatpush1.msra.mxu0 %v58
    %195 = vmatprep.subr.mxu0 0.0
    %196 = vmatpush1.msra.mxu0 %v57
    %197 = vmatprep.subr.mxu0 0.0
    %198 = vmatpush1.msra.mxu0 %v56
    %199 = vmatprep.subr.mxu0 0.0
    %200 = vmatpush1.msra.mxu0 %v55
    %201 = vmatprep.subr.mxu0 0.0
    %202 = vmatpush2.msra.mxu0 0.0
    %203 = vmatprep.subr.mxu0 0.0
    %204 = vmatpush2.msra.mxu0 0.0
    %205 = vmatprep.subr.mxu0 0.0
    %206 = vmatpush2.msra.mxu0 0.0
    %207 = vmatprep.subr.mxu0 0.0
    %208 = vmatpush2.msra.mxu0 0.0
    %209 = vmatprep.subr.mxu0 0.0
    %210 = vmatpush2.msra.mxu0 0.0
    %211 = vmatprep.subr.mxu0 0.0
    %212 = vmatpush2.msra.mxu0 0.0
    %213 = vmatprep.subr.mxu0 0.0
    %214 = vmatpush2.msra.mxu0 0.0
    %215 = vmatprep.subr.mxu0 0.0
    %216 = vmatpush2.msra.mxu0 0.0
    %217 = vmatprep.subr.mxu0 0.0
    %218 = vmatpush2.msra.mxu0 0.0
    %219 = vmatprep.subr.mxu0 0.0
    %220 = vmatpush2.msra.mxu0 0.0
    %221 = vmatprep.subr.mxu0 0.0
    %222 = vmatpush2.msra.mxu0 0.0
    %223 = vmatprep.subr.mxu0 0.0
    %224 = vmatpush2.msra.mxu0 0.0
    %225 = vmatprep.subr.mxu0 0.0
    %226 = vmatpush2.msra.mxu0 0.0
    %227 = vmatprep.subr.mxu0 0.0
    %228 = vmatpush2.msra.mxu0 0.0
    %229 = vmatprep.subr.mxu0 0.0
    %230 = vmatpush2.msra.mxu0 0.0
    %231 = vmatprep.subr.mxu0 0.0
    %232 = vmatpush2.msra.mxu0 0.0
    %233 = vmatprep.mubr.f32.mxu0 0.0
    %234 = vmatmul.mubr.f32.gmra.mxu0 %v97
    %v235 = vpop.f32.mrf.mxu0
    %v236 = vadd.f32 %v82, %v235
    %v237 = vpop.f32.mrf.mxu0
    %238 = vdwg.mxu0
    %239 = vmatprep.subr.mxu0 0.0
    %240 = vmatpush1.msra.mxu0 0.0
    %241 = vmatprep.subr.mxu0 0.0
    %242 = vmatpush1.msra.mxu0 0.0
    %243 = vmatprep.subr.mxu0 0.0
    %244 = vmatpush1.msra.mxu0 0.0
    %245 = vmatprep.subr.mxu0 0.0
    %246 = vmatpush1.msra.mxu0 0.0
    %247 = vmatprep.subr.mxu0 0.0
    %248 = vmatpush1.msra.mxu0 0.0
    %249 = vmatprep.subr.mxu0 0.0
    %250 = vmatpush1.msra.mxu0 0.0
    %251 = vmatprep.subr.mxu0 0.0
    %252 = vmatpush1.msra.mxu0 0.0
    %253 = vmatprep.subr.mxu0 0.0
    %254 = vmatpush1.msra.mxu0 0.0
    %255 = vmatprep.subr.mxu0 0.0
    %256 = vmatpush1.msra.mxu0 0.0
    %257 = vmatprep.subr.mxu0 0.0
    %258 = vmatpush1.msra.mxu0 0.0
    %259 = vmatprep.subr.mxu0 0.0
    %260 = vmatpush1.msra.mxu0 0.0
    %261 = vmatprep.subr.mxu0 0.0
    %262 = vmatpush1.msra.mxu0 0.0
    %263 = vmatprep.subr.mxu0 0.0
    %264 = vmatpush1.msra.mxu0 %v62
    %265 = vmatprep.subr.mxu0 0.0
    %266 = vmatpush1.msra.mxu0 %v61
    %267 = vmatprep.subr.mxu0 0.0
    %268 = vmatpush1.msra.mxu0 %v60
    %269 = vmatprep.subr.mxu0 0.0
    %270 = vmatpush1.msra.mxu0 %v59
    %271 = vmatprep.subr.mxu0 0.0
    %272 = vmatpush2.msra.mxu0 0.0
    %273 = vmatprep.subr.mxu0 0.0
    %274 = vmatpush2.msra.mxu0 0.0
    %275 = vmatprep.subr.mxu0 0.0
    %276 = vmatpush2.msra.mxu0 0.0
    %277 = vmatprep.subr.mxu0 0.0
    %278 = vmatpush2.msra.mxu0 0.0
    %279 = vmatprep.subr.mxu0 0.0
    %280 = vmatpush2.msra.mxu0 0.0
    %281 = vmatprep.subr.mxu0 0.0
    %282 = vmatpush2.msra.mxu0 0.0
    %283 = vmatprep.subr.mxu0 0.0
    %284 = vmatpush2.msra.mxu0 0.0
    %285 = vmatprep.subr.mxu0 0.0
    %286 = vmatpush2.msra.mxu0 0.0
    %287 = vmatprep.subr.mxu0 0.0
    %288 = vmatpush2.msra.mxu0 0.0
    %289 = vmatprep.subr.mxu0 0.0
    %290 = vmatpush2.msra.mxu0 0.0
    %291 = vmatprep.subr.mxu0 0.0
    %292 = vmatpush2.msra.mxu0 0.0
    %293 = vmatprep.subr.mxu0 0.0
    %294 = vmatpush2.msra.mxu0 0.0
    %295 = vmatprep.subr.mxu0 0.0
    %296 = vmatpush2.msra.mxu0 0.0
    %297 = vmatprep.subr.mxu0 0.0
    %298 = vmatpush2.msra.mxu0 0.0
    %299 = vmatprep.subr.mxu0 0.0
    %300 = vmatpush2.msra.mxu0 0.0
    %301 = vmatprep.subr.mxu0 0.0
    %302 = vmatpush2.msra.mxu0 0.0
    %303 = vmatprep.mubr.f32.mxu0 0.0
    %304 = vmatmul.mubr.f32.gmra.mxu0 %v97
    %v305 = vpop.f32.mrf.mxu0
    %v306 = vadd.f32 %v86, %v305
    %v307 = vpop.f32.mrf.mxu0
    %308 = vdwg.mxu0
    %309 = vmatprep.subr.mxu0 0.0
    %310 = vmatpush1.msra.mxu0 0.0
    %311 = vmatprep.subr.mxu0 0.0
    %312 = vmatpush1.msra.mxu0 0.0
    %313 = vmatprep.subr.mxu0 0.0
    %314 = vmatpush1.msra.mxu0 0.0
    %315 = vmatprep.subr.mxu0 0.0
    %316 = vmatpush1.msra.mxu0 0.0
    %317 = vmatprep.subr.mxu0 0.0
    %318 = vmatpush1.msra.mxu0 0.0
    %319 = vmatprep.subr.mxu0 0.0
    %320 = vmatpush1.msra.mxu0 0.0
    %321 = vmatprep.subr.mxu0 0.0
    %322 = vmatpush1.msra.mxu0 0.0
    %323 = vmatprep.subr.mxu0 0.0
    %324 = vmatpush1.msra.mxu0 0.0
    %325 = vmatprep.subr.mxu0 0.0
    %326 = vmatpush1.msra.mxu0 0.0
    %327 = vmatprep.subr.mxu0 0.0
    %328 = vmatpush1.msra.mxu0 0.0
    %329 = vmatprep.subr.mxu0 0.0
    %330 = vmatpush1.msra.mxu0 0.0
    %331 = vmatprep.subr.mxu0 0.0
    %332 = vmatpush1.msra.mxu0 0.0
    %333 = vmatprep.subr.mxu0 0.0
    %334 = vmatpush1.msra.mxu0 %v66
    %335 = vmatprep.subr.mxu0 0.0
    %336 = vmatpush1.msra.mxu0 %v65
    %337 = vmatprep.subr.mxu0 0.0
    %338 = vmatpush1.msra.mxu0 %v64
    %339 = vmatprep.subr.mxu0 0.0
    %340 = vmatpush1.msra.mxu0 %v63
    %341 = vmatprep.subr.mxu0 0.0
    %342 = vmatpush2.msra.mxu0 0.0
    %343 = vmatprep.subr.mxu0 0.0
    %344 = vmatpush2.msra.mxu0 0.0
    %345 = vmatprep.subr.mxu0 0.0
    %346 = vmatpush2.msra.mxu0 0.0
    %347 = vmatprep.subr.mxu0 0.0
    %348 = vmatpush2.msra.mxu0 0.0
    %349 = vmatprep.subr.mxu0 0.0
    %350 = vmatpush2.msra.mxu0 0.0
    %351 = vmatprep.subr.mxu0 0.0
    %352 = vmatpush2.msra.mxu0 0.0
    %353 = vmatprep.subr.mxu0 0.0
    %354 = vmatpush2.msra.mxu0 0.0
    %355 = vmatprep.subr.mxu0 0.0
    %356 = vmatpush2.msra.mxu0 0.0
    %357 = vmatprep.subr.mxu0 0.0
    %358 = vmatpush2.msra.mxu0 0.0
    %359 = vmatprep.subr.mxu0 0.0
    %360 = vmatpush2.msra.mxu0 0.0
    %361 = vmatprep.subr.mxu0 0.0
    %362 = vmatpush2.msra.mxu0 0.0
    %363 = vmatprep.subr.mxu0 0.0
    %364 = vmatpush2.msra.mxu0 0.0
    %365 = vmatprep.subr.mxu0 0.0
    %366 = vmatpush2.msra.mxu0 0.0
    %367 = vmatprep.subr.mxu0 0.0
    %368 = vmatpush2.msra.mxu0 0.0
    %369 = vmatprep.subr.mxu0 0.0
    %370 = vmatpush2.msra.mxu0 0.0
    %371 = vmatprep.subr.mxu0 0.0
    %372 = vmatpush2.msra.mxu0 0.0
    %373 = vmatprep.mubr.f32.mxu0 0.0
    %374 = vmatmul.mubr.f32.gmra.mxu0 %v97
    %v375 = vpop.f32.mrf.mxu0
    %v376 = vadd.f32 %v90, %v375
    %v377 = vpop.f32.mrf.mxu0
    %378 = vdwg.mxu0
    %v379 = vld [vmem:[%s5] sm:$0xff]
    %v380 = vld [vmem:[%s5 + $0x8] sm:$0xff]
    %v381 = vld [vmem:[%s5 + $0x10] sm:$0xff]
    %v382 = vld [vmem:[%s5 + $0x18] sm:$0xff]
    %v383 = vld [vmem:[%s5 + $0x20] sm:$0xff]
    %v384 = vld [vmem:[%s5 + $0x28] sm:$0xff]
    %v385 = vld [vmem:[%s5 + $0x30] sm:$0xff]
    %v386 = vld [vmem:[%s5 + $0x38] sm:$0xff]
    %v387 = vld [vmem:[%s5 + $0x40] sm:$0xff]
    %v388 = vld [vmem:[%s5 + $0x48] sm:$0xff]
    %v389 = vld [vmem:[%s5 + $0x50] sm:$0xff]
    %v390 = vld [vmem:[%s5 + $0x58] sm:$0xff]
    %v391 = vld [vmem:[%s5 + $0x60] sm:$0xff]
    %v392 = vld [vmem:[%s5 + $0x68] sm:$0xff]
    %v393 = vld [vmem:[%s5 + $0x70] sm:$0xff]
    %v394 = vld [vmem:[%s5 + $0x78] sm:$0xff]
    %v395 = vld [vmem:[%s6] sm:$0x1]
    %v396 = vld [vmem:[%s6 + $0x1] sm:$0x1]
    %v397 = vld [vmem:[%s6 + $0x2] sm:$0x1]
    %v398 = vld [vmem:[%s6 + $0x3] sm:$0x1]
    %v403 = vlaneseq
    %v404 = vshrl.u32 %v403, 7
    %v405 = vsub.s32 0, %v404
    %v406 = vrot.slane %v395, %v405
    %v407 = vlaneseq
    %v408 = vshrl.u32 %v407, 7
    %v409 = vsub.s32 0, %v408
    %v410 = vrot.slane %v396, %v409
    %v411 = vlaneseq
    %v412 = vshrl.u32 %v411, 7
    %v413 = vsub.s32 0, %v412
    %v414 = vrot.slane %v397, %v413
    %v415 = vlaneseq
    %v416 = vshrl.u32 %v415, 7
    %v417 = vsub.s32 0, %v416
    %v418 = vrot.slane %v398, %v417
    %v424 = vsel %vm95, %v49, 0
    %426 = vmatprep.subr.mxu0 0.0
    %427 = vmatpush1.msra.mxu0 0.0
    %428 = vmatprep.subr.mxu0 0.0
    %429 = vmatpush1.msra.mxu0 0.0
    %430 = vmatprep.subr.mxu0 0.0
    %431 = vmatpush1.msra.mxu0 0.0
    %432 = vmatprep.subr.mxu0 0.0
    %433 = vmatpush1.msra.mxu0 0.0
    %434 = vmatprep.subr.mxu0 0.0
    %435 = vmatpush1.msra.mxu0 0.0
    %436 = vmatprep.subr.mxu0 0.0
    %437 = vmatpush1.msra.mxu0 0.0
    %438 = vmatprep.subr.mxu0 0.0
    %439 = vmatpush1.msra.mxu0 0.0
    %440 = vmatprep.subr.mxu0 0.0
    %441 = vmatpush1.msra.mxu0 0.0
    %442 = vmatprep.subr.mxu0 0.0
    %443 = vmatpush1.msra.mxu0 0.0
    %444 = vmatprep.subr.mxu0 0.0
    %445 = vmatpush1.msra.mxu0 0.0
    %446 = vmatprep.subr.mxu0 0.0
    %447 = vmatpush1.msra.mxu0 0.0
    %448 = vmatprep.subr.mxu0 0.0
    %449 = vmatpush1.msra.mxu0 0.0
    %450 = vmatprep.subr.mxu0 0.0
    %451 = vmatpush1.msra.mxu0 %v382
    %452 = vmatprep.subr.mxu0 0.0
    %453 = vmatpush1.msra.mxu0 %v381
    %454 = vmatprep.subr.mxu0 0.0
    %455 = vmatpush1.msra.mxu0 %v380
    %456 = vmatprep.subr.mxu0 0.0
    %457 = vmatpush1.msra.mxu0 %v379
    %458 = vmatprep.subr.mxu0 0.0
    %459 = vmatpush2.msra.mxu0 0.0
    %460 = vmatprep.subr.mxu0 0.0
    %461 = vmatpush2.msra.mxu0 0.0
    %462 = vmatprep.subr.mxu0 0.0
    %463 = vmatpush2.msra.mxu0 0.0
    %464 = vmatprep.subr.mxu0 0.0
    %465 = vmatpush2.msra.mxu0 0.0
    %466 = vmatprep.subr.mxu0 0.0
    %467 = vmatpush2.msra.mxu0 0.0
    %468 = vmatprep.subr.mxu0 0.0
    %469 = vmatpush2.msra.mxu0 0.0
    %470 = vmatprep.subr.mxu0 0.0
    %471 = vmatpush2.msra.mxu0 0.0
    %472 = vmatprep.subr.mxu0 0.0
    %473 = vmatpush2.msra.mxu0 0.0
    %474 = vmatprep.subr.mxu0 0.0
    %475 = vmatpush2.msra.mxu0 0.0
    %476 = vmatprep.subr.mxu0 0.0
    %477 = vmatpush2.msra.mxu0 0.0
    %478 = vmatprep.subr.mxu0 0.0
    %479 = vmatpush2.msra.mxu0 0.0
    %480 = vmatprep.subr.mxu0 0.0
    %481 = vmatpush2.msra.mxu0 0.0
    %482 = vmatprep.subr.mxu0 0.0
    %483 = vmatpush2.msra.mxu0 0.0
    %484 = vmatprep.subr.mxu0 0.0
    %485 = vmatpush2.msra.mxu0 0.0
    %486 = vmatprep.subr.mxu0 0.0
    %487 = vmatpush2.msra.mxu0 0.0
    %488 = vmatprep.subr.mxu0 0.0
    %489 = vmatpush2.msra.mxu0 0.0
    %490 = vmatprep.mubr.f32.mxu0 0.0
    %491 = vmatmul.mubr.f32.gmra.mxu0 %v424
    %v492 = vpop.f32.mrf.mxu0
    %v493 = vadd.f32 %v406, %v492
    %v494 = vpop.f32.mrf.mxu0
    %495 = vdwg.mxu0
    %496 = vmatprep.subr.mxu0 0.0
    %497 = vmatpush1.msra.mxu0 0.0
    %498 = vmatprep.subr.mxu0 0.0
    %499 = vmatpush1.msra.mxu0 0.0
    %500 = vmatprep.subr.mxu0 0.0
    %501 = vmatpush1.msra.mxu0 0.0
    %502 = vmatprep.subr.mxu0 0.0
    %503 = vmatpush1.msra.mxu0 0.0
    %504 = vmatprep.subr.mxu0 0.0
    %505 = vmatpush1.msra.mxu0 0.0
    %506 = vmatprep.subr.mxu0 0.0
    %507 = vmatpush1.msra.mxu0 0.0
    %508 = vmatprep.subr.mxu0 0.0
    %509 = vmatpush1.msra.mxu0 0.0
    %510 = vmatprep.subr.mxu0 0.0
    %511 = vmatpush1.msra.mxu0 0.0
    %512 = vmatprep.subr.mxu0 0.0
    %513 = vmatpush1.msra.mxu0 0.0
    %514 = vmatprep.subr.mxu0 0.0
    %515 = vmatpush1.msra.mxu0 0.0
    %516 = vmatprep.subr.mxu0 0.0
    %517 = vmatpush1.msra.mxu0 0.0
    %518 = vmatprep.subr.mxu0 0.0
    %519 = vmatpush1.msra.mxu0 0.0
    %520 = vmatprep.subr.mxu0 0.0
    %521 = vmatpush1.msra.mxu0 %v386
    %522 = vmatprep.subr.mxu0 0.0
    %523 = vmatpush1.msra.mxu0 %v385
    %524 = vmatprep.subr.mxu0 0.0
    %525 = vmatpush1.msra.mxu0 %v384
    %526 = vmatprep.subr.mxu0 0.0
    %527 = vmatpush1.msra.mxu0 %v383
    %528 = vmatprep.subr.mxu0 0.0
    %529 = vmatpush2.msra.mxu0 0.0
    %530 = vmatprep.subr.mxu0 0.0
    %531 = vmatpush2.msra.mxu0 0.0
    %532 = vmatprep.subr.mxu0 0.0
    %533 = vmatpush2.msra.mxu0 0.0
    %534 = vmatprep.subr.mxu0 0.0
    %535 = vmatpush2.msra.mxu0 0.0
    %536 = vmatprep.subr.mxu0 0.0
    %537 = vmatpush2.msra.mxu0 0.0
    %538 = vmatprep.subr.mxu0 0.0
    %539 = vmatpush2.msra.mxu0 0.0
    %540 = vmatprep.subr.mxu0 0.0
    %541 = vmatpush2.msra.mxu0 0.0
    %542 = vmatprep.subr.mxu0 0.0
    %543 = vmatpush2.msra.mxu0 0.0
    %544 = vmatprep.subr.mxu0 0.0
    %545 = vmatpush2.msra.mxu0 0.0
    %546 = vmatprep.subr.mxu0 0.0
    %547 = vmatpush2.msra.mxu0 0.0
    %548 = vmatprep.subr.mxu0 0.0
    %549 = vmatpush2.msra.mxu0 0.0
    %550 = vmatprep.subr.mxu0 0.0
    %551 = vmatpush2.msra.mxu0 0.0
    %552 = vmatprep.subr.mxu0 0.0
    %553 = vmatpush2.msra.mxu0 0.0
    %554 = vmatprep.subr.mxu0 0.0
    %555 = vmatpush2.msra.mxu0 0.0
    %556 = vmatprep.subr.mxu0 0.0
    %557 = vmatpush2.msra.mxu0 0.0
    %558 = vmatprep.subr.mxu0 0.0
    %559 = vmatpush2.msra.mxu0 0.0
    %560 = vmatprep.mubr.f32.mxu0 0.0
    %561 = vmatmul.mubr.f32.gmra.mxu0 %v424
    %v562 = vpop.f32.mrf.mxu0
    %v563 = vadd.f32 %v410, %v562
    %v564 = vpop.f32.mrf.mxu0
    %565 = vdwg.mxu0
    %566 = vmatprep.subr.mxu0 0.0
    %567 = vmatpush1.msra.mxu0 0.0
    %568 = vmatprep.subr.mxu0 0.0
    %569 = vmatpush1.msra.mxu0 0.0
    %570 = vmatprep.subr.mxu0 0.0
    %571 = vmatpush1.msra.mxu0 0.0
    %572 = vmatprep.subr.mxu0 0.0
    %573 = vmatpush1.msra.mxu0 0.0
    %574 = vmatprep.subr.mxu0 0.0
    %575 = vmatpush1.msra.mxu0 0.0
    %576 = vmatprep.subr.mxu0 0.0
    %577 = vmatpush1.msra.mxu0 0.0
    %578 = vmatprep.subr.mxu0 0.0
    %579 = vmatpush1.msra.mxu0 0.0
    %580 = vmatprep.subr.mxu0 0.0
    %581 = vmatpush1.msra.mxu0 0.0
    %582 = vmatprep.subr.mxu0 0.0
    %583 = vmatpush1.msra.mxu0 0.0
    %584 = vmatprep.subr.mxu0 0.0
    %585 = vmatpush1.msra.mxu0 0.0
    %586 = vmatprep.subr.mxu0 0.0
    %587 = vmatpush1.msra.mxu0 0.0
    %588 = vmatprep.subr.mxu0 0.0
    %589 = vmatpush1.msra.mxu0 0.0
    %590 = vmatprep.subr.mxu0 0.0
    %591 = vmatpush1.msra.mxu0 %v390
    %592 = vmatprep.subr.mxu0 0.0
    %593 = vmatpush1.msra.mxu0 %v389
    %594 = vmatprep.subr.mxu0 0.0
    %595 = vmatpush1.msra.mxu0 %v388
    %596 = vmatprep.subr.mxu0 0.0
    %597 = vmatpush1.msra.mxu0 %v387
    %598 = vmatprep.subr.mxu0 0.0
    %599 = vmatpush2.msra.mxu0 0.0
    %600 = vmatprep.subr.mxu0 0.0
    %601 = vmatpush2.msra.mxu0 0.0
    %602 = vmatprep.subr.mxu0 0.0
    %603 = vmatpush2.msra.mxu0 0.0
    %604 = vmatprep.subr.mxu0 0.0
    %605 = vmatpush2.msra.mxu0 0.0
    %606 = vmatprep.subr.mxu0 0.0
    %607 = vmatpush2.msra.mxu0 0.0
    %608 = vmatprep.subr.mxu0 0.0
    %609 = vmatpush2.msra.mxu0 0.0
    %610 = vmatprep.subr.mxu0 0.0
    %611 = vmatpush2.msra.mxu0 0.0
    %612 = vmatprep.subr.mxu0 0.0
    %613 = vmatpush2.msra.mxu0 0.0
    %614 = vmatprep.subr.mxu0 0.0
    %615 = vmatpush2.msra.mxu0 0.0
    %616 = vmatprep.subr.mxu0 0.0
    %617 = vmatpush2.msra.mxu0 0.0
    %618 = vmatprep.subr.mxu0 0.0
    %619 = vmatpush2.msra.mxu0 0.0
    %620 = vmatprep.subr.mxu0 0.0
    %621 = vmatpush2.msra.mxu0 0.0
    %622 = vmatprep.subr.mxu0 0.0
    %623 = vmatpush2.msra.mxu0 0.0
    %624 = vmatprep.subr.mxu0 0.0
    %625 = vmatpush2.msra.mxu0 0.0
    %626 = vmatprep.subr.mxu0 0.0
    %627 = vmatpush2.msra.mxu0 0.0
    %628 = vmatprep.subr.mxu0 0.0
    %629 = vmatpush2.msra.mxu0 0.0
    %630 = vmatprep.mubr.f32.mxu0 0.0
    %631 = vmatmul.mubr.f32.gmra.mxu0 %v424
    %v632 = vpop.f32.mrf.mxu0
    %v633 = vadd.f32 %v414, %v632
    %v634 = vpop.f32.mrf.mxu0
    %635 = vdwg.mxu0
    %636 = vmatprep.subr.mxu0 0.0
    %637 = vmatpush1.msra.mxu0 0.0
    %638 = vmatprep.subr.mxu0 0.0
    %639 = vmatpush1.msra.mxu0 0.0
    %640 = vmatprep.subr.mxu0 0.0
    %641 = vmatpush1.msra.mxu0 0.0
    %642 = vmatprep.subr.mxu0 0.0
    %643 = vmatpush1.msra.mxu0 0.0
    %644 = vmatprep.subr.mxu0 0.0
    %645 = vmatpush1.msra.mxu0 0.0
    %646 = vmatprep.subr.mxu0 0.0
    %647 = vmatpush1.msra.mxu0 0.0
    %648 = vmatprep.subr.mxu0 0.0
    %649 = vmatpush1.msra.mxu0 0.0
    %650 = vmatprep.subr.mxu0 0.0
    %651 = vmatpush1.msra.mxu0 0.0
    %652 = vmatprep.subr.mxu0 0.0
    %653 = vmatpush1.msra.mxu0 0.0
    %654 = vmatprep.subr.mxu0 0.0
    %655 = vmatpush1.msra.mxu0 0.0
    %656 = vmatprep.subr.mxu0 0.0
    %657 = vmatpush1.msra.mxu0 0.0
    %658 = vmatprep.subr.mxu0 0.0
    %659 = vmatpush1.msra.mxu0 0.0
    %660 = vmatprep.subr.mxu0 0.0
    %661 = vmatpush1.msra.mxu0 %v394
    %662 = vmatprep.subr.mxu0 0.0
    %663 = vmatpush1.msra.mxu0 %v393
    %664 = vmatprep.subr.mxu0 0.0
    %665 = vmatpush1.msra.mxu0 %v392
    %666 = vmatprep.subr.mxu0 0.0
    %667 = vmatpush1.msra.mxu0 %v391
    %668 = vmatprep.subr.mxu0 0.0
    %669 = vmatpush2.msra.mxu0 0.0
    %670 = vmatprep.subr.mxu0 0.0
    %671 = vmatpush2.msra.mxu0 0.0
    %672 = vmatprep.subr.mxu0 0.0
    %673 = vmatpush2.msra.mxu0 0.0
    %674 = vmatprep.subr.mxu0 0.0
    %675 = vmatpush2.msra.mxu0 0.0
    %676 = vmatprep.subr.mxu0 0.0
    %677 = vmatpush2.msra.mxu0 0.0
    %678 = vmatprep.subr.mxu0 0.0
    %679 = vmatpush2.msra.mxu0 0.0
    %680 = vmatprep.subr.mxu0 0.0
    %681 = vmatpush2.msra.mxu0 0.0
    %682 = vmatprep.subr.mxu0 0.0
    %683 = vmatpush2.msra.mxu0 0.0
    %684 = vmatprep.subr.mxu0 0.0
    %685 = vmatpush2.msra.mxu0 0.0
    %686 = vmatprep.subr.mxu0 0.0
    %687 = vmatpush2.msra.mxu0 0.0
    %688 = vmatprep.subr.mxu0 0.0
    %689 = vmatpush2.msra.mxu0 0.0
    %690 = vmatprep.subr.mxu0 0.0
    %691 = vmatpush2.msra.mxu0 0.0
    %692 = vmatprep.subr.mxu0 0.0
    %693 = vmatpush2.msra.mxu0 0.0
    %694 = vmatprep.subr.mxu0 0.0
    %695 = vmatpush2.msra.mxu0 0.0
    %696 = vmatprep.subr.mxu0 0.0
    %697 = vmatpush2.msra.mxu0 0.0
    %698 = vmatprep.subr.mxu0 0.0
    %699 = vmatpush2.msra.mxu0 0.0
    %700 = vmatprep.mubr.f32.mxu0 0.0
    %701 = vmatmul.mubr.f32.gmra.mxu0 %v424
    %v702 = vpop.f32.mrf.mxu0
    %v703 = vadd.f32 %v418, %v702
    %v704 = vpop.f32.mrf.mxu0
    %705 = vdwg.mxu0
    %v706 = vld [vmem:[%s7] sm:$0xff]
    %v707 = vld [vmem:[%s7 + $0x8] sm:$0xff]
    %v708 = vld [vmem:[%s7 + $0x10] sm:$0xff]
    %v709 = vld [vmem:[%s7 + $0x18] sm:$0xff]
    %v710 = vld [vmem:[%s7 + $0x20] sm:$0xff]
    %v711 = vld [vmem:[%s7 + $0x28] sm:$0xff]
    %v712 = vld [vmem:[%s7 + $0x30] sm:$0xff]
    %v713 = vld [vmem:[%s7 + $0x38] sm:$0xff]
    %v714 = vld [vmem:[%s7 + $0x40] sm:$0xff]
    %v715 = vld [vmem:[%s7 + $0x48] sm:$0xff]
    %v716 = vld [vmem:[%s7 + $0x50] sm:$0xff]
    %v717 = vld [vmem:[%s7 + $0x58] sm:$0xff]
    %v718 = vld [vmem:[%s7 + $0x60] sm:$0xff]
    %v719 = vld [vmem:[%s7 + $0x68] sm:$0xff]
    %v720 = vld [vmem:[%s7 + $0x70] sm:$0xff]
    %v721 = vld [vmem:[%s7 + $0x78] sm:$0xff]
    %v722 = vld [vmem:[%s8] sm:$0x1]
    %v723 = vld [vmem:[%s8 + $0x1] sm:$0x1]
    %v724 = vld [vmem:[%s8 + $0x2] sm:$0x1]
    %v725 = vld [vmem:[%s8 + $0x3] sm:$0x1]
    %v730 = vlaneseq
    %v731 = vshrl.u32 %v730, 7
    %v732 = vsub.s32 0, %v731
    %v733 = vrot.slane %v722, %v732
    %v734 = vlaneseq
    %v735 = vshrl.u32 %v734, 7
    %v736 = vsub.s32 0, %v735
    %v737 = vrot.slane %v723, %v736
    %v738 = vlaneseq
    %v739 = vshrl.u32 %v738, 7
    %v740 = vsub.s32 0, %v739
    %v741 = vrot.slane %v724, %v740
    %v742 = vlaneseq
    %v743 = vshrl.u32 %v742, 7
    %v744 = vsub.s32 0, %v743
    %v745 = vrot.slane %v725, %v744
    %v751 = vsel %vm95, %v50, 0
    %753 = vmatprep.subr.mxu0 0.0
    %754 = vmatpush1.msra.mxu0 0.0
    %755 = vmatprep.subr.mxu0 0.0
    %756 = vmatpush1.msra.mxu0 0.0
    %757 = vmatprep.subr.mxu0 0.0
    %758 = vmatpush1.msra.mxu0 0.0
    %759 = vmatprep.subr.mxu0 0.0
    %760 = vmatpush1.msra.mxu0 0.0
    %761 = vmatprep.subr.mxu0 0.0
    %762 = vmatpush1.msra.mxu0 0.0
    %763 = vmatprep.subr.mxu0 0.0
    %764 = vmatpush1.msra.mxu0 0.0
    %765 = vmatprep.subr.mxu0 0.0
    %766 = vmatpush1.msra.mxu0 0.0
    %767 = vmatprep.subr.mxu0 0.0
    %768 = vmatpush1.msra.mxu0 0.0
    %769 = vmatprep.subr.mxu0 0.0
    %770 = vmatpush1.msra.mxu0 0.0
    %771 = vmatprep.subr.mxu0 0.0
    %772 = vmatpush1.msra.mxu0 0.0
    %773 = vmatprep.subr.mxu0 0.0
    %774 = vmatpush1.msra.mxu0 0.0
    %775 = vmatprep.subr.mxu0 0.0
    %776 = vmatpush1.msra.mxu0 0.0
    %777 = vmatprep.subr.mxu0 0.0
    %778 = vmatpush1.msra.mxu0 %v709
    %779 = vmatprep.subr.mxu0 0.0
    %780 = vmatpush1.msra.mxu0 %v708
    %781 = vmatprep.subr.mxu0 0.0
    %782 = vmatpush1.msra.mxu0 %v707
    %783 = vmatprep.subr.mxu0 0.0
    %784 = vmatpush1.msra.mxu0 %v706
    %785 = vmatprep.subr.mxu0 0.0
    %786 = vmatpush2.msra.mxu0 0.0
    %787 = vmatprep.subr.mxu0 0.0
    %788 = vmatpush2.msra.mxu0 0.0
    %789 = vmatprep.subr.mxu0 0.0
    %790 = vmatpush2.msra.mxu0 0.0
    %791 = vmatprep.subr.mxu0 0.0
    %792 = vmatpush2.msra.mxu0 0.0
    %793 = vmatprep.subr.mxu0 0.0
    %794 = vmatpush2.msra.mxu0 0.0
    %795 = vmatprep.subr.mxu0 0.0
    %796 = vmatpush2.msra.mxu0 0.0
    %797 = vmatprep.subr.mxu0 0.0
    %798 = vmatpush2.msra.mxu0 0.0
    %799 = vmatprep.subr.mxu0 0.0
    %800 = vmatpush2.msra.mxu0 0.0
    %801 = vmatprep.subr.mxu0 0.0
    %802 = vmatpush2.msra.mxu0 0.0
    %803 = vmatprep.subr.mxu0 0.0
    %804 = vmatpush2.msra.mxu0 0.0
    %805 = vmatprep.subr.mxu0 0.0
    %806 = vmatpush2.msra.mxu0 0.0
    %807 = vmatprep.subr.mxu0 0.0
    %808 = vmatpush2.msra.mxu0 0.0
    %809 = vmatprep.subr.mxu0 0.0
    %810 = vmatpush2.msra.mxu0 0.0
    %811 = vmatprep.subr.mxu0 0.0
    %812 = vmatpush2.msra.mxu0 0.0
    %813 = vmatprep.subr.mxu0 0.0
    %814 = vmatpush2.msra.mxu0 0.0
    %815 = vmatprep.subr.mxu0 0.0
    %816 = vmatpush2.msra.mxu0 0.0
    %817 = vmatprep.mubr.f32.mxu0 0.0
    %818 = vmatmul.mubr.f32.gmra.mxu0 %v751
    %v819 = vpop.f32.mrf.mxu0
    %v820 = vadd.f32 %v733, %v819
    %v821 = vpop.f32.mrf.mxu0
    %822 = vdwg.mxu0
    %823 = vmatprep.subr.mxu0 0.0
    %824 = vmatpush1.msra.mxu0 0.0
    %825 = vmatprep.subr.mxu0 0.0
    %826 = vmatpush1.msra.mxu0 0.0
    %827 = vmatprep.subr.mxu0 0.0
    %828 = vmatpush1.msra.mxu0 0.0
    %829 = vmatprep.subr.mxu0 0.0
    %830 = vmatpush1.msra.mxu0 0.0
    %831 = vmatprep.subr.mxu0 0.0
    %832 = vmatpush1.msra.mxu0 0.0
    %833 = vmatprep.subr.mxu0 0.0
    %834 = vmatpush1.msra.mxu0 0.0
    %835 = vmatprep.subr.mxu0 0.0
    %836 = vmatpush1.msra.mxu0 0.0
    %837 = vmatprep.subr.mxu0 0.0
    %838 = vmatpush1.msra.mxu0 0.0
    %839 = vmatprep.subr.mxu0 0.0
    %840 = vmatpush1.msra.mxu0 0.0
    %841 = vmatprep.subr.mxu0 0.0
    %842 = vmatpush1.msra.mxu0 0.0
    %843 = vmatprep.subr.mxu0 0.0
    %844 = vmatpush1.msra.mxu0 0.0
    %845 = vmatprep.subr.mxu0 0.0
    %846 = vmatpush1.msra.mxu0 0.0
    %847 = vmatprep.subr.mxu0 0.0
    %848 = vmatpush1.msra.mxu0 %v713
    %849 = vmatprep.subr.mxu0 0.0
    %850 = vmatpush1.msra.mxu0 %v712
    %851 = vmatprep.subr.mxu0 0.0
    %852 = vmatpush1.msra.mxu0 %v711
    %853 = vmatprep.subr.mxu0 0.0
    %854 = vmatpush1.msra.mxu0 %v710
    %855 = vmatprep.subr.mxu0 0.0
    %856 = vmatpush2.msra.mxu0 0.0
    %857 = vmatprep.subr.mxu0 0.0
    %858 = vmatpush2.msra.mxu0 0.0
    %859 = vmatprep.subr.mxu0 0.0
    %860 = vmatpush2.msra.mxu0 0.0
    %861 = vmatprep.subr.mxu0 0.0
    %862 = vmatpush2.msra.mxu0 0.0
    %863 = vmatprep.subr.mxu0 0.0
    %864 = vmatpush2.msra.mxu0 0.0
    %865 = vmatprep.subr.mxu0 0.0
    %866 = vmatpush2.msra.mxu0 0.0
    %867 = vmatprep.subr.mxu0 0.0
    %868 = vmatpush2.msra.mxu0 0.0
    %869 = vmatprep.subr.mxu0 0.0
    %870 = vmatpush2.msra.mxu0 0.0
    %871 = vmatprep.subr.mxu0 0.0
    %872 = vmatpush2.msra.mxu0 0.0
    %873 = vmatprep.subr.mxu0 0.0
    %874 = vmatpush2.msra.mxu0 0.0
    %875 = vmatprep.subr.mxu0 0.0
    %876 = vmatpush2.msra.mxu0 0.0
    %877 = vmatprep.subr.mxu0 0.0
    %878 = vmatpush2.msra.mxu0 0.0
    %879 = vmatprep.subr.mxu0 0.0
    %880 = vmatpush2.msra.mxu0 0.0
    %881 = vmatprep.subr.mxu0 0.0
    %882 = vmatpush2.msra.mxu0 0.0
    %883 = vmatprep.subr.mxu0 0.0
    %884 = vmatpush2.msra.mxu0 0.0
    %885 = vmatprep.subr.mxu0 0.0
    %886 = vmatpush2.msra.mxu0 0.0
    %887 = vmatprep.mubr.f32.mxu0 0.0
    %888 = vmatmul.mubr.f32.gmra.mxu0 %v751
    %v889 = vpop.f32.mrf.mxu0
    %v890 = vadd.f32 %v737, %v889
    %v891 = vpop.f32.mrf.mxu0
    %892 = vdwg.mxu0
    %893 = vmatprep.subr.mxu0 0.0
    %894 = vmatpush1.msra.mxu0 0.0
    %895 = vmatprep.subr.mxu0 0.0
    %896 = vmatpush1.msra.mxu0 0.0
    %897 = vmatprep.subr.mxu0 0.0
    %898 = vmatpush1.msra.mxu0 0.0
    %899 = vmatprep.subr.mxu0 0.0
    %900 = vmatpush1.msra.mxu0 0.0
    %901 = vmatprep.subr.mxu0 0.0
    %902 = vmatpush1.msra.mxu0 0.0
    %903 = vmatprep.subr.mxu0 0.0
    %904 = vmatpush1.msra.mxu0 0.0
    %905 = vmatprep.subr.mxu0 0.0
    %906 = vmatpush1.msra.mxu0 0.0
    %907 = vmatprep.subr.mxu0 0.0
    %908 = vmatpush1.msra.mxu0 0.0
    %909 = vmatprep.subr.mxu0 0.0
    %910 = vmatpush1.msra.mxu0 0.0
    %911 = vmatprep.subr.mxu0 0.0
    %912 = vmatpush1.msra.mxu0 0.0
    %913 = vmatprep.subr.mxu0 0.0
    %914 = vmatpush1.msra.mxu0 0.0
    %915 = vmatprep.subr.mxu0 0.0
    %916 = vmatpush1.msra.mxu0 0.0
    %917 = vmatprep.subr.mxu0 0.0
    %918 = vmatpush1.msra.mxu0 %v717
    %919 = vmatprep.subr.mxu0 0.0
    %920 = vmatpush1.msra.mxu0 %v716
    %921 = vmatprep.subr.mxu0 0.0
    %922 = vmatpush1.msra.mxu0 %v715
    %923 = vmatprep.subr.mxu0 0.0
    %924 = vmatpush1.msra.mxu0 %v714
    %925 = vmatprep.subr.mxu0 0.0
    %926 = vmatpush2.msra.mxu0 0.0
    %927 = vmatprep.subr.mxu0 0.0
    %928 = vmatpush2.msra.mxu0 0.0
    %929 = vmatprep.subr.mxu0 0.0
    %930 = vmatpush2.msra.mxu0 0.0
    %931 = vmatprep.subr.mxu0 0.0
    %932 = vmatpush2.msra.mxu0 0.0
    %933 = vmatprep.subr.mxu0 0.0
    %934 = vmatpush2.msra.mxu0 0.0
    %935 = vmatprep.subr.mxu0 0.0
    %936 = vmatpush2.msra.mxu0 0.0
    %937 = vmatprep.subr.mxu0 0.0
    %938 = vmatpush2.msra.mxu0 0.0
    %939 = vmatprep.subr.mxu0 0.0
    %940 = vmatpush2.msra.mxu0 0.0
    %941 = vmatprep.subr.mxu0 0.0
    %942 = vmatpush2.msra.mxu0 0.0
    %943 = vmatprep.subr.mxu0 0.0
    %944 = vmatpush2.msra.mxu0 0.0
    %945 = vmatprep.subr.mxu0 0.0
    %946 = vmatpush2.msra.mxu0 0.0
    %947 = vmatprep.subr.mxu0 0.0
    %948 = vmatpush2.msra.mxu0 0.0
    %949 = vmatprep.subr.mxu0 0.0
    %950 = vmatpush2.msra.mxu0 0.0
    %951 = vmatprep.subr.mxu0 0.0
    %952 = vmatpush2.msra.mxu0 0.0
    %953 = vmatprep.subr.mxu0 0.0
    %954 = vmatpush2.msra.mxu0 0.0
    %955 = vmatprep.subr.mxu0 0.0
    %956 = vmatpush2.msra.mxu0 0.0
    %957 = vmatprep.mubr.f32.mxu0 0.0
    %958 = vmatmul.mubr.f32.gmra.mxu0 %v751
    %v959 = vpop.f32.mrf.mxu0
    %v960 = vadd.f32 %v741, %v959
    %v961 = vpop.f32.mrf.mxu0
    %962 = vdwg.mxu0
    %963 = vmatprep.subr.mxu0 0.0
    %964 = vmatpush1.msra.mxu0 0.0
    %965 = vmatprep.subr.mxu0 0.0
    %966 = vmatpush1.msra.mxu0 0.0
    %967 = vmatprep.subr.mxu0 0.0
    %968 = vmatpush1.msra.mxu0 0.0
    %969 = vmatprep.subr.mxu0 0.0
    %970 = vmatpush1.msra.mxu0 0.0
    %971 = vmatprep.subr.mxu0 0.0
    %972 = vmatpush1.msra.mxu0 0.0
    %973 = vmatprep.subr.mxu0 0.0
    %974 = vmatpush1.msra.mxu0 0.0
    %975 = vmatprep.subr.mxu0 0.0
    %976 = vmatpush1.msra.mxu0 0.0
    %977 = vmatprep.subr.mxu0 0.0
    %978 = vmatpush1.msra.mxu0 0.0
    %979 = vmatprep.subr.mxu0 0.0
    %980 = vmatpush1.msra.mxu0 0.0
    %981 = vmatprep.subr.mxu0 0.0
    %982 = vmatpush1.msra.mxu0 0.0
    %983 = vmatprep.subr.mxu0 0.0
    %984 = vmatpush1.msra.mxu0 0.0
    %985 = vmatprep.subr.mxu0 0.0
    %986 = vmatpush1.msra.mxu0 0.0
    %987 = vmatprep.subr.mxu0 0.0
    %988 = vmatpush1.msra.mxu0 %v721
    %989 = vmatprep.subr.mxu0 0.0
    %990 = vmatpush1.msra.mxu0 %v720
    %991 = vmatprep.subr.mxu0 0.0
    %992 = vmatpush1.msra.mxu0 %v719
    %993 = vmatprep.subr.mxu0 0.0
    %994 = vmatpush1.msra.mxu0 %v718
    %995 = vmatprep.subr.mxu0 0.0
    %996 = vmatpush2.msra.mxu0 0.0
    %997 = vmatprep.subr.mxu0 0.0
    %998 = vmatpush2.msra.mxu0 0.0
    %999 = vmatprep.subr.mxu0 0.0
    %1000 = vmatpush2.msra.mxu0 0.0
    %1001 = vmatprep.subr.mxu0 0.0
    %1002 = vmatpush2.msra.mxu0 0.0
    %1003 = vmatprep.subr.mxu0 0.0
    %1004 = vmatpush2.msra.mxu0 0.0
    %1005 = vmatprep.subr.mxu0 0.0
    %1006 = vmatpush2.msra.mxu0 0.0
    %1007 = vmatprep.subr.mxu0 0.0
    %1008 = vmatpush2.msra.mxu0 0.0
    %1009 = vmatprep.subr.mxu0 0.0
    %1010 = vmatpush2.msra.mxu0 0.0
    %1011 = vmatprep.subr.mxu0 0.0
    %1012 = vmatpush2.msra.mxu0 0.0
    %1013 = vmatprep.subr.mxu0 0.0
    %1014 = vmatpush2.msra.mxu0 0.0
    %1015 = vmatprep.subr.mxu0 0.0
    %1016 = vmatpush2.msra.mxu0 0.0
    %1017 = vmatprep.subr.mxu0 0.0
    %1018 = vmatpush2.msra.mxu0 0.0
    %1019 = vmatprep.subr.mxu0 0.0
    %1020 = vmatpush2.msra.mxu0 0.0
    %1021 = vmatprep.subr.mxu0 0.0
    %1022 = vmatpush2.msra.mxu0 0.0
    %1023 = vmatprep.subr.mxu0 0.0
    %1024 = vmatpush2.msra.mxu0 0.0
    %1025 = vmatprep.subr.mxu0 0.0
    %1026 = vmatpush2.msra.mxu0 0.0
    %1027 = vmatprep.mubr.f32.mxu0 0.0
    %1028 = vmatmul.mubr.f32.gmra.mxu0 %v751
    %v1029 = vpop.f32.mrf.mxu0
    %v1030 = vadd.f32 %v745, %v1029
    %v1031 = vpop.f32.mrf.mxu0
    %1032 = vdwg.mxu0
    %vm1033 = vcmask 64512
    %v1035 = vsel %vm1033, %v820, 0
    %v1038 = vsel %vm1033, %v166, 0
    %1040 = vmatprep.subr.mxu0 0.0
    %1041 = vmatpush1.xpose.msra.mxu0 0.0
    %1042 = vmatprep.subr.mxu0 0.0
    %1043 = vmatpush1.xpose.msra.mxu0 0.0
    %1044 = vmatprep.subr.mxu0 0.0
    %1045 = vmatpush1.xpose.msra.mxu0 0.0
    %1046 = vmatprep.subr.mxu0 0.0
    %1047 = vmatpush1.xpose.msra.mxu0 0.0
    %1048 = vmatprep.subr.mxu0 0.0
    %1049 = vmatpush1.xpose.msra.mxu0 0.0
    %1050 = vmatprep.subr.mxu0 0.0
    %1051 = vmatpush1.xpose.msra.mxu0 0.0
    %1052 = vmatprep.subr.mxu0 0.0
    %1053 = vmatpush1.xpose.msra.mxu0 0.0
    %1054 = vmatprep.subr.mxu0 0.0
    %1055 = vmatpush1.xpose.msra.mxu0 0.0
    %1056 = vmatprep.subr.mxu0 0.0
    %1057 = vmatpush1.xpose.msra.mxu0 0.0
    %1058 = vmatprep.subr.mxu0 0.0
    %1059 = vmatpush1.xpose.msra.mxu0 0.0
    %1060 = vmatprep.subr.mxu0 0.0
    %1061 = vmatpush1.xpose.msra.mxu0 0.0
    %1062 = vmatprep.subr.mxu0 0.0
    %1063 = vmatpush1.xpose.msra.mxu0 0.0
    %1064 = vmatprep.subr.mxu0 0.0
    %1065 = vmatpush1.xpose.msra.mxu0 0.0
    %1066 = vmatprep.subr.mxu0 0.0
    %1067 = vmatpush1.xpose.msra.mxu0 0.0
    %1068 = vmatprep.subr.mxu0 0.0
    %1069 = vmatpush1.xpose.msra.mxu0 0.0
    %1070 = vmatprep.subr.mxu0 0.0
    %1071 = vmatpush1.xpose.msra.mxu0 %v1038
    %1072 = vmatprep.subr.mxu0 0.0
    %1073 = vmatpush2.xpose.msra.mxu0 0.0
    %1074 = vmatprep.subr.mxu0 0.0
    %1075 = vmatpush2.xpose.msra.mxu0 0.0
    %1076 = vmatprep.subr.mxu0 0.0
    %1077 = vmatpush2.xpose.msra.mxu0 0.0
    %1078 = vmatprep.subr.mxu0 0.0
    %1079 = vmatpush2.xpose.msra.mxu0 0.0
    %1080 = vmatprep.subr.mxu0 0.0
    %1081 = vmatpush2.xpose.msra.mxu0 0.0
    %1082 = vmatprep.subr.mxu0 0.0
    %1083 = vmatpush2.xpose.msra.mxu0 0.0
    %1084 = vmatprep.subr.mxu0 0.0
    %1085 = vmatpush2.xpose.msra.mxu0 0.0
    %1086 = vmatprep.subr.mxu0 0.0
    %1087 = vmatpush2.xpose.msra.mxu0 0.0
    %1088 = vmatprep.subr.mxu0 0.0
    %1089 = vmatpush2.xpose.msra.mxu0 0.0
    %1090 = vmatprep.subr.mxu0 0.0
    %1091 = vmatpush2.xpose.msra.mxu0 0.0
    %1092 = vmatprep.subr.mxu0 0.0
    %1093 = vmatpush2.xpose.msra.mxu0 0.0
    %1094 = vmatprep.subr.mxu0 0.0
    %1095 = vmatpush2.xpose.msra.mxu0 0.0
    %1096 = vmatprep.subr.mxu0 0.0
    %1097 = vmatpush2.xpose.msra.mxu0 0.0
    %1098 = vmatprep.subr.mxu0 0.0
    %1099 = vmatpush2.xpose.msra.mxu0 0.0
    %1100 = vmatprep.subr.mxu0 0.0
    %1101 = vmatpush2.xpose.msra.mxu0 0.0
    %1102 = vmatprep.subr.mxu0 0.0
    %1103 = vmatpush2.xpose.msra.mxu0 0.0
    %1104 = vmatprep.mubr.f32.mxu0 0.0
    %1105 = vmatmul.mubr.f32.gmra.mxu0 %v1035
    %v1106 = vpop.f32.mrf.mxu0
    %v1107 = vadd.f32 0.0, %v1106
    %v1108 = vpop.f32.mrf.mxu0
    %1109 = vdwg.mxu0
    %v1111 = vsel %vm1033, %v890, 0
    %v1114 = vsel %vm1033, %v236, 0
    %1116 = vmatprep.subr.mxu0 0.0
    %1117 = vmatpush1.xpose.msra.mxu0 0.0
    %1118 = vmatprep.subr.mxu0 0.0
    %1119 = vmatpush1.xpose.msra.mxu0 0.0
    %1120 = vmatprep.subr.mxu0 0.0
    %1121 = vmatpush1.xpose.msra.mxu0 0.0
    %1122 = vmatprep.subr.mxu0 0.0
    %1123 = vmatpush1.xpose.msra.mxu0 0.0
    %1124 = vmatprep.subr.mxu0 0.0
    %1125 = vmatpush1.xpose.msra.mxu0 0.0
    %1126 = vmatprep.subr.mxu0 0.0
    %1127 = vmatpush1.xpose.msra.mxu0 0.0
    %1128 = vmatprep.subr.mxu0 0.0
    %1129 = vmatpush1.xpose.msra.mxu0 0.0
    %1130 = vmatprep.subr.mxu0 0.0
    %1131 = vmatpush1.xpose.msra.mxu0 0.0
    %1132 = vmatprep.subr.mxu0 0.0
    %1133 = vmatpush1.xpose.msra.mxu0 0.0
    %1134 = vmatprep.subr.mxu0 0.0
    %1135 = vmatpush1.xpose.msra.mxu0 0.0
    %1136 = vmatprep.subr.mxu0 0.0
    %1137 = vmatpush1.xpose.msra.mxu0 0.0
    %1138 = vmatprep.subr.mxu0 0.0
    %1139 = vmatpush1.xpose.msra.mxu0 0.0
    %1140 = vmatprep.subr.mxu0 0.0
    %1141 = vmatpush1.xpose.msra.mxu0 0.0
    %1142 = vmatprep.subr.mxu0 0.0
    %1143 = vmatpush1.xpose.msra.mxu0 0.0
    %1144 = vmatprep.subr.mxu0 0.0
    %1145 = vmatpush1.xpose.msra.mxu0 0.0
    %1146 = vmatprep.subr.mxu0 0.0
    %1147 = vmatpush1.xpose.msra.mxu0 %v1114
    %1148 = vmatprep.subr.mxu0 0.0
    %1149 = vmatpush2.xpose.msra.mxu0 0.0
    %1150 = vmatprep.subr.mxu0 0.0
    %1151 = vmatpush2.xpose.msra.mxu0 0.0
    %1152 = vmatprep.subr.mxu0 0.0
    %1153 = vmatpush2.xpose.msra.mxu0 0.0
    %1154 = vmatprep.subr.mxu0 0.0
    %1155 = vmatpush2.xpose.msra.mxu0 0.0
    %1156 = vmatprep.subr.mxu0 0.0
    %1157 = vmatpush2.xpose.msra.mxu0 0.0
    %1158 = vmatprep.subr.mxu0 0.0
    %1159 = vmatpush2.xpose.msra.mxu0 0.0
    %1160 = vmatprep.subr.mxu0 0.0
    %1161 = vmatpush2.xpose.msra.mxu0 0.0
    %1162 = vmatprep.subr.mxu0 0.0
    %1163 = vmatpush2.xpose.msra.mxu0 0.0
    %1164 = vmatprep.subr.mxu0 0.0
    %1165 = vmatpush2.xpose.msra.mxu0 0.0
    %1166 = vmatprep.subr.mxu0 0.0
    %1167 = vmatpush2.xpose.msra.mxu0 0.0
    %1168 = vmatprep.subr.mxu0 0.0
    %1169 = vmatpush2.xpose.msra.mxu0 0.0
    %1170 = vmatprep.subr.mxu0 0.0
    %1171 = vmatpush2.xpose.msra.mxu0 0.0
    %1172 = vmatprep.subr.mxu0 0.0
    %1173 = vmatpush2.xpose.msra.mxu0 0.0
    %1174 = vmatprep.subr.mxu0 0.0
    %1175 = vmatpush2.xpose.msra.mxu0 0.0
    %1176 = vmatprep.subr.mxu0 0.0
    %1177 = vmatpush2.xpose.msra.mxu0 0.0
    %1178 = vmatprep.subr.mxu0 0.0
    %1179 = vmatpush2.xpose.msra.mxu0 0.0
    %1180 = vmatprep.mubr.f32.mxu0 0.0
    %1181 = vmatmul.mubr.f32.gmra.mxu0 %v1111
    %v1182 = vpop.f32.mrf.mxu0
    %v1183 = vadd.f32 0.0, %v1182
    %v1184 = vpop.f32.mrf.mxu0
    %1185 = vdwg.mxu0
    %v1187 = vsel %vm1033, %v960, 0
    %v1190 = vsel %vm1033, %v306, 0
    %1192 = vmatprep.subr.mxu0 0.0
    %1193 = vmatpush1.xpose.msra.mxu0 0.0
    %1194 = vmatprep.subr.mxu0 0.0
    %1195 = vmatpush1.xpose.msra.mxu0 0.0
    %1196 = vmatprep.subr.mxu0 0.0
    %1197 = vmatpush1.xpose.msra.mxu0 0.0
    %1198 = vmatprep.subr.mxu0 0.0
    %1199 = vmatpush1.xpose.msra.mxu0 0.0
    %1200 = vmatprep.subr.mxu0 0.0
    %1201 = vmatpush1.xpose.msra.mxu0 0.0
    %1202 = vmatprep.subr.mxu0 0.0
    %1203 = vmatpush1.xpose.msra.mxu0 0.0
    %1204 = vmatprep.subr.mxu0 0.0
    %1205 = vmatpush1.xpose.msra.mxu0 0.0
    %1206 = vmatprep.subr.mxu0 0.0
    %1207 = vmatpush1.xpose.msra.mxu0 0.0
    %1208 = vmatprep.subr.mxu0 0.0
    %1209 = vmatpush1.xpose.msra.mxu0 0.0
    %1210 = vmatprep.subr.mxu0 0.0
    %1211 = vmatpush1.xpose.msra.mxu0 0.0
    %1212 = vmatprep.subr.mxu0 0.0
    %1213 = vmatpush1.xpose.msra.mxu0 0.0
    %1214 = vmatprep.subr.mxu0 0.0
    %1215 = vmatpush1.xpose.msra.mxu0 0.0
    %1216 = vmatprep.subr.mxu0 0.0
    %1217 = vmatpush1.xpose.msra.mxu0 0.0
    %1218 = vmatprep.subr.mxu0 0.0
    %1219 = vmatpush1.xpose.msra.mxu0 0.0
    %1220 = vmatprep.subr.mxu0 0.0
    %1221 = vmatpush1.xpose.msra.mxu0 0.0
    %1222 = vmatprep.subr.mxu0 0.0
    %1223 = vmatpush1.xpose.msra.mxu0 %v1190
    %1224 = vmatprep.subr.mxu0 0.0
    %1225 = vmatpush2.xpose.msra.mxu0 0.0
    %1226 = vmatprep.subr.mxu0 0.0
    %1227 = vmatpush2.xpose.msra.mxu0 0.0
    %1228 = vmatprep.subr.mxu0 0.0
    %1229 = vmatpush2.xpose.msra.mxu0 0.0
    %1230 = vmatprep.subr.mxu0 0.0
    %1231 = vmatpush2.xpose.msra.mxu0 0.0
    %1232 = vmatprep.subr.mxu0 0.0
    %1233 = vmatpush2.xpose.msra.mxu0 0.0
    %1234 = vmatprep.subr.mxu0 0.0
    %1235 = vmatpush2.xpose.msra.mxu0 0.0
    %1236 = vmatprep.subr.mxu0 0.0
    %1237 = vmatpush2.xpose.msra.mxu0 0.0
    %1238 = vmatprep.subr.mxu0 0.0
    %1239 = vmatpush2.xpose.msra.mxu0 0.0
    %1240 = vmatprep.subr.mxu0 0.0
    %1241 = vmatpush2.xpose.msra.mxu0 0.0
    %1242 = vmatprep.subr.mxu0 0.0
    %1243 = vmatpush2.xpose.msra.mxu0 0.0
    %1244 = vmatprep.subr.mxu0 0.0
    %1245 = vmatpush2.xpose.msra.mxu0 0.0
    %1246 = vmatprep.subr.mxu0 0.0
    %1247 = vmatpush2.xpose.msra.mxu0 0.0
    %1248 = vmatprep.subr.mxu0 0.0
    %1249 = vmatpush2.xpose.msra.mxu0 0.0
    %1250 = vmatprep.subr.mxu0 0.0
    %1251 = vmatpush2.xpose.msra.mxu0 0.0
    %1252 = vmatprep.subr.mxu0 0.0
    %1253 = vmatpush2.xpose.msra.mxu0 0.0
    %1254 = vmatprep.subr.mxu0 0.0
    %1255 = vmatpush2.xpose.msra.mxu0 0.0
    %1256 = vmatprep.mubr.f32.mxu0 0.0
    %1257 = vmatmul.mubr.f32.gmra.mxu0 %v1187
    %v1258 = vpop.f32.mrf.mxu0
    %v1259 = vadd.f32 0.0, %v1258
    %v1260 = vpop.f32.mrf.mxu0
    %1261 = vdwg.mxu0
    %v1263 = vsel %vm1033, %v1030, 0
    %v1266 = vsel %vm1033, %v376, 0
    %1268 = vmatprep.subr.mxu0 0.0
    %1269 = vmatpush1.xpose.msra.mxu0 0.0
    %1270 = vmatprep.subr.mxu0 0.0
    %1271 = vmatpush1.xpose.msra.mxu0 0.0
    %1272 = vmatprep.subr.mxu0 0.0
    %1273 = vmatpush1.xpose.msra.mxu0 0.0
    %1274 = vmatprep.subr.mxu0 0.0
    %1275 = vmatpush1.xpose.msra.mxu0 0.0
    %1276 = vmatprep.subr.mxu0 0.0
    %1277 = vmatpush1.xpose.msra.mxu0 0.0
    %1278 = vmatprep.subr.mxu0 0.0
    %1279 = vmatpush1.xpose.msra.mxu0 0.0
    %1280 = vmatprep.subr.mxu0 0.0
    %1281 = vmatpush1.xpose.msra.mxu0 0.0
    %1282 = vmatprep.subr.mxu0 0.0
    %1283 = vmatpush1.xpose.msra.mxu0 0.0
    %1284 = vmatprep.subr.mxu0 0.0
    %1285 = vmatpush1.xpose.msra.mxu0 0.0
    %1286 = vmatprep.subr.mxu0 0.0
    %1287 = vmatpush1.xpose.msra.mxu0 0.0
    %1288 = vmatprep.subr.mxu0 0.0
    %1289 = vmatpush1.xpose.msra.mxu0 0.0
    %1290 = vmatprep.subr.mxu0 0.0
    %1291 = vmatpush1.xpose.msra.mxu0 0.0
    %1292 = vmatprep.subr.mxu0 0.0
    %1293 = vmatpush1.xpose.msra.mxu0 0.0
    %1294 = vmatprep.subr.mxu0 0.0
    %1295 = vmatpush1.xpose.msra.mxu0 0.0
    %1296 = vmatprep.subr.mxu0 0.0
    %1297 = vmatpush1.xpose.msra.mxu0 0.0
    %1298 = vmatprep.subr.mxu0 0.0
    %1299 = vmatpush1.xpose.msra.mxu0 %v1266
    %1300 = vmatprep.subr.mxu0 0.0
    %1301 = vmatpush2.xpose.msra.mxu0 0.0
    %1302 = vmatprep.subr.mxu0 0.0
    %1303 = vmatpush2.xpose.msra.mxu0 0.0
    %1304 = vmatprep.subr.mxu0 0.0
    %1305 = vmatpush2.xpose.msra.mxu0 0.0
    %1306 = vmatprep.subr.mxu0 0.0
    %1307 = vmatpush2.xpose.msra.mxu0 0.0
    %1308 = vmatprep.subr.mxu0 0.0
    %1309 = vmatpush2.xpose.msra.mxu0 0.0
    %1310 = vmatprep.subr.mxu0 0.0
    %1311 = vmatpush2.xpose.msra.mxu0 0.0
    %1312 = vmatprep.subr.mxu0 0.0
    %1313 = vmatpush2.xpose.msra.mxu0 0.0
    %1314 = vmatprep.subr.mxu0 0.0
    %1315 = vmatpush2.xpose.msra.mxu0 0.0
    %1316 = vmatprep.subr.mxu0 0.0
    %1317 = vmatpush2.xpose.msra.mxu0 0.0
    %1318 = vmatprep.subr.mxu0 0.0
    %1319 = vmatpush2.xpose.msra.mxu0 0.0
    %1320 = vmatprep.subr.mxu0 0.0
    %1321 = vmatpush2.xpose.msra.mxu0 0.0
    %1322 = vmatprep.subr.mxu0 0.0
    %1323 = vmatpush2.xpose.msra.mxu0 0.0
    %1324 = vmatprep.subr.mxu0 0.0
    %1325 = vmatpush2.xpose.msra.mxu0 0.0
    %1326 = vmatprep.subr.mxu0 0.0
    %1327 = vmatpush2.xpose.msra.mxu0 0.0
    %1328 = vmatprep.subr.mxu0 0.0
    %1329 = vmatpush2.xpose.msra.mxu0 0.0
    %1330 = vmatprep.subr.mxu0 0.0
    %1331 = vmatpush2.xpose.msra.mxu0 0.0
    %1332 = vmatprep.mubr.f32.mxu0 0.0
    %1333 = vmatmul.mubr.f32.gmra.mxu0 %v1263
    %v1334 = vpop.f32.mrf.mxu0
    %v1335 = vadd.f32 0.0, %v1334
    %v1336 = vpop.f32.mrf.mxu0
    %1337 = vdwg.mxu0
    %v1338 = vsel %vm1033, %v1107, -inf
    %1339 = vmax.xlane.f32.xlu0 %v1338
    %v1340 = vpop.xlane.xlu0 %1339
    %v1341 = vsel %vm1033, %v1183, -inf
    %1342 = vmax.xlane.f32.xlu0 %v1341
    %v1343 = vpop.xlane.xlu0 %1342
    %v1344 = vsel %vm1033, %v1259, -inf
    %1345 = vmax.xlane.f32.xlu0 %v1344
    %v1346 = vpop.xlane.xlu0 %1345
    %v1347 = vsel %vm1033, %v1335, -inf
    %1348 = vmax.xlane.f32.xlu0 %v1347
    %v1349 = vpop.xlane.xlu0 %1348
    %v1350 = vsub.f32 %v1107, %v1340
    %v1351 = vsub.f32 %v1183, %v1343
    %v1352 = vsub.f32 %v1259, %v1346
    %v1353 = vsub.f32 %v1335, %v1349
    %v1354 = vmul.f32 %v1350, 1.442695
    %v1355 = vpow.pop %v1354
    %v1356 = vmul.f32 %v1351, 1.442695
    %v1357 = vpow.pop %v1356
    %v1358 = vmul.f32 %v1352, 1.442695
    %v1359 = vpow.pop %v1358
    %v1360 = vmul.f32 %v1353, 1.442695
    %v1361 = vpow.pop %v1360
    %v1362 = vsel %vm1033, %v1355, 0.0
    %1363 = vadd.xlane.f32.xlu0 %v1362
    %v1364 = vpop.xlane.xlu0 %1363
    %v1365 = vsel %vm1033, %v1357, 0.0
    %1366 = vadd.xlane.f32.xlu0 %v1365
    %v1367 = vpop.xlane.xlu0 %1366
    %v1368 = vsel %vm1033, %v1359, 0.0
    %1369 = vadd.xlane.f32.xlu0 %v1368
    %v1370 = vpop.xlane.xlu0 %1369
    %v1371 = vsel %vm1033, %v1361, 0.0
    %1372 = vadd.xlane.f32.xlu0 %v1371
    %v1373 = vpop.xlane.xlu0 %1372
    %v1374 = vrcp.pop %v1364
    %v1375 = vrcp.pop %v1367
    %v1376 = vrcp.pop %v1370
    %v1377 = vrcp.pop %v1373
    %v1378 = vmul.f32 %v1364, %v1374
    %v1379 = vmul.f32 %v1367, %v1375
    %v1380 = vmul.f32 %v1370, %v1376
    %v1381 = vmul.f32 %v1373, %v1377
    %v1382 = vsub.f32 2.0, %v1378
    %v1383 = vsub.f32 2.0, %v1379
    %v1384 = vsub.f32 2.0, %v1380
    %v1385 = vsub.f32 2.0, %v1381
    %v1386 = vmul.f32 %v1374, %v1382
    %v1387 = vmul.f32 %v1375, %v1383
    %v1388 = vmul.f32 %v1376, %v1384
    %v1389 = vmul.f32 %v1377, %v1385
    %v1390 = vmul.f32 %v1355, %v1386
    %v1391 = vmul.f32 %v1357, %v1387
    %v1392 = vmul.f32 %v1359, %v1388
    %v1393 = vmul.f32 %v1361, %v1389
    %1394 = vst.msk [vmem:[#allocation4] sm:$0xff] %vm1033, %v1390
    %1395 = vst.msk [vmem:[#allocation4 + $0x8] sm:$0xff] %vm1033, %v1391
    %1396 = vst.msk [vmem:[#allocation4 + $0x10] sm:$0xff] %vm1033, %v1392
    %1397 = vst.msk [vmem:[#allocation4 + $0x18] sm:$0xff] %vm1033, %v1393
    %v1399 = vsel %vm1033, %v1390, 0
    %1401 = vmatprep.subr.mxu0 0.0
    %1402 = vmatpush1.msra.mxu0 0.0
    %1403 = vmatprep.subr.mxu0 0.0
    %1404 = vmatpush1.msra.mxu0 0.0
    %1405 = vmatprep.subr.mxu0 0.0
    %1406 = vmatpush1.msra.mxu0 0.0
    %1407 = vmatprep.subr.mxu0 0.0
    %1408 = vmatpush1.msra.mxu0 0.0
    %1409 = vmatprep.subr.mxu0 0.0
    %1410 = vmatpush1.msra.mxu0 0.0
    %1411 = vmatprep.subr.mxu0 0.0
    %1412 = vmatpush1.msra.mxu0 0.0
    %1413 = vmatprep.subr.mxu0 0.0
    %1414 = vmatpush1.msra.mxu0 0.0
    %1415 = vmatprep.subr.mxu0 0.0
    %1416 = vmatpush1.msra.mxu0 0.0
    %1417 = vmatprep.subr.mxu0 0.0
    %1418 = vmatpush1.msra.mxu0 0.0
    %1419 = vmatprep.subr.mxu0 0.0
    %1420 = vmatpush1.msra.mxu0 0.0
    %1421 = vmatprep.subr.mxu0 0.0
    %1422 = vmatpush1.msra.mxu0 0.0
    %1423 = vmatprep.subr.mxu0 0.0
    %1424 = vmatpush1.msra.mxu0 0.0
    %1425 = vmatprep.subr.mxu0 0.0
    %1426 = vmatpush1.msra.mxu0 0.0
    %1427 = vmatprep.subr.mxu0 0.0
    %1428 = vmatpush1.msra.mxu0 0.0
    %1429 = vmatprep.subr.mxu0 0.0
    %1430 = vmatpush1.msra.mxu0 0.0
    %1431 = vmatprep.subr.mxu0 0.0
    %1432 = vmatpush1.msra.mxu0 %v493
    %1433 = vmatprep.subr.mxu0 0.0
    %1434 = vmatpush2.msra.mxu0 0.0
    %1435 = vmatprep.subr.mxu0 0.0
    %1436 = vmatpush2.msra.mxu0 0.0
    %1437 = vmatprep.subr.mxu0 0.0
    %1438 = vmatpush2.msra.mxu0 0.0
    %1439 = vmatprep.subr.mxu0 0.0
    %1440 = vmatpush2.msra.mxu0 0.0
    %1441 = vmatprep.subr.mxu0 0.0
    %1442 = vmatpush2.msra.mxu0 0.0
    %1443 = vmatprep.subr.mxu0 0.0
    %1444 = vmatpush2.msra.mxu0 0.0
    %1445 = vmatprep.subr.mxu0 0.0
    %1446 = vmatpush2.msra.mxu0 0.0
    %1447 = vmatprep.subr.mxu0 0.0
    %1448 = vmatpush2.msra.mxu0 0.0
    %1449 = vmatprep.subr.mxu0 0.0
    %1450 = vmatpush2.msra.mxu0 0.0
    %1451 = vmatprep.subr.mxu0 0.0
    %1452 = vmatpush2.msra.mxu0 0.0
    %1453 = vmatprep.subr.mxu0 0.0
    %1454 = vmatpush2.msra.mxu0 0.0
    %1455 = vmatprep.subr.mxu0 0.0
    %1456 = vmatpush2.msra.mxu0 0.0
    %1457 = vmatprep.subr.mxu0 0.0
    %1458 = vmatpush2.msra.mxu0 0.0
    %1459 = vmatprep.subr.mxu0 0.0
    %1460 = vmatpush2.msra.mxu0 0.0
    %1461 = vmatprep.subr.mxu0 0.0
    %1462 = vmatpush2.msra.mxu0 0.0
    %1463 = vmatprep.subr.mxu0 0.0
    %1464 = vmatpush2.msra.mxu0 0.0
    %1465 = vmatprep.mubr.f32.mxu0 0.0
    %1466 = vmatmul.mubr.f32.gmra.mxu0 %v1399
    %v1467 = vpop.f32.mrf.mxu0
    %v1468 = vadd.f32 0.0, %v1467
    %v1469 = vpop.f32.mrf.mxu0
    %1470 = vdwg.mxu0
    %v1472 = vsel %vm1033, %v1391, 0
    %1474 = vmatprep.subr.mxu0 0.0
    %1475 = vmatpush1.msra.mxu0 0.0
    %1476 = vmatprep.subr.mxu0 0.0
    %1477 = vmatpush1.msra.mxu0 0.0
    %1478 = vmatprep.subr.mxu0 0.0
    %1479 = vmatpush1.msra.mxu0 0.0
    %1480 = vmatprep.subr.mxu0 0.0
    %1481 = vmatpush1.msra.mxu0 0.0
    %1482 = vmatprep.subr.mxu0 0.0
    %1483 = vmatpush1.msra.mxu0 0.0
    %1484 = vmatprep.subr.mxu0 0.0
    %1485 = vmatpush1.msra.mxu0 0.0
    %1486 = vmatprep.subr.mxu0 0.0
    %1487 = vmatpush1.msra.mxu0 0.0
    %1488 = vmatprep.subr.mxu0 0.0
    %1489 = vmatpush1.msra.mxu0 0.0
    %1490 = vmatprep.subr.mxu0 0.0
    %1491 = vmatpush1.msra.mxu0 0.0
    %1492 = vmatprep.subr.mxu0 0.0
    %1493 = vmatpush1.msra.mxu0 0.0
    %1494 = vmatprep.subr.mxu0 0.0
    %1495 = vmatpush1.msra.mxu0 0.0
    %1496 = vmatprep.subr.mxu0 0.0
    %1497 = vmatpush1.msra.mxu0 0.0
    %1498 = vmatprep.subr.mxu0 0.0
    %1499 = vmatpush1.msra.mxu0 0.0
    %1500 = vmatprep.subr.mxu0 0.0
    %1501 = vmatpush1.msra.mxu0 0.0
    %1502 = vmatprep.subr.mxu0 0.0
    %1503 = vmatpush1.msra.mxu0 0.0
    %1504 = vmatprep.subr.mxu0 0.0
    %1505 = vmatpush1.msra.mxu0 %v563
    %1506 = vmatprep.subr.mxu0 0.0
    %1507 = vmatpush2.msra.mxu0 0.0
    %1508 = vmatprep.subr.mxu0 0.0
    %1509 = vmatpush2.msra.mxu0 0.0
    %1510 = vmatprep.subr.mxu0 0.0
    %1511 = vmatpush2.msra.mxu0 0.0
    %1512 = vmatprep.subr.mxu0 0.0
    %1513 = vmatpush2.msra.mxu0 0.0
    %1514 = vmatprep.subr.mxu0 0.0
    %1515 = vmatpush2.msra.mxu0 0.0
    %1516 = vmatprep.subr.mxu0 0.0
    %1517 = vmatpush2.msra.mxu0 0.0
    %1518 = vmatprep.subr.mxu0 0.0
    %1519 = vmatpush2.msra.mxu0 0.0
    %1520 = vmatprep.subr.mxu0 0.0
    %1521 = vmatpush2.msra.mxu0 0.0
    %1522 = vmatprep.subr.mxu0 0.0
    %1523 = vmatpush2.msra.mxu0 0.0
    %1524 = vmatprep.subr.mxu0 0.0
    %1525 = vmatpush2.msra.mxu0 0.0
    %1526 = vmatprep.subr.mxu0 0.0
    %1527 = vmatpush2.msra.mxu0 0.0
    %1528 = vmatprep.subr.mxu0 0.0
    %1529 = vmatpush2.msra.mxu0 0.0
    %1530 = vmatprep.subr.mxu0 0.0
    %1531 = vmatpush2.msra.mxu0 0.0
    %1532 = vmatprep.subr.mxu0 0.0
    %1533 = vmatpush2.msra.mxu0 0.0
    %1534 = vmatprep.subr.mxu0 0.0
    %1535 = vmatpush2.msra.mxu0 0.0
    %1536 = vmatprep.subr.mxu0 0.0
    %1537 = vmatpush2.msra.mxu0 0.0
    %1538 = vmatprep.mubr.f32.mxu0 0.0
    %1539 = vmatmul.mubr.f32.gmra.mxu0 %v1472
    %v1540 = vpop.f32.mrf.mxu0
    %v1541 = vadd.f32 0.0, %v1540
    %v1542 = vpop.f32.mrf.mxu0
    %1543 = vdwg.mxu0
    %v1545 = vsel %vm1033, %v1392, 0
    %1547 = vmatprep.subr.mxu0 0.0
    %1548 = vmatpush1.msra.mxu0 0.0
    %1549 = vmatprep.subr.mxu0 0.0
    %1550 = vmatpush1.msra.mxu0 0.0
    %1551 = vmatprep.subr.mxu0 0.0
    %1552 = vmatpush1.msra.mxu0 0.0
    %1553 = vmatprep.subr.mxu0 0.0
    %1554 = vmatpush1.msra.mxu0 0.0
    %1555 = vmatprep.subr.mxu0 0.0
    %1556 = vmatpush1.msra.mxu0 0.0
    %1557 = vmatprep.subr.mxu0 0.0
    %1558 = vmatpush1.msra.mxu0 0.0
    %1559 = vmatprep.subr.mxu0 0.0
    %1560 = vmatpush1.msra.mxu0 0.0
    %1561 = vmatprep.subr.mxu0 0.0
    %1562 = vmatpush1.msra.mxu0 0.0
    %1563 = vmatprep.subr.mxu0 0.0
    %1564 = vmatpush1.msra.mxu0 0.0
    %1565 = vmatprep.subr.mxu0 0.0
    %1566 = vmatpush1.msra.mxu0 0.0
    %1567 = vmatprep.subr.mxu0 0.0
    %1568 = vmatpush1.msra.mxu0 0.0
    %1569 = vmatprep.subr.mxu0 0.0
    %1570 = vmatpush1.msra.mxu0 0.0
    %1571 = vmatprep.subr.mxu0 0.0
    %1572 = vmatpush1.msra.mxu0 0.0
    %1573 = vmatprep.subr.mxu0 0.0
    %1574 = vmatpush1.msra.mxu0 0.0
    %1575 = vmatprep.subr.mxu0 0.0
    %1576 = vmatpush1.msra.mxu0 0.0
    %1577 = vmatprep.subr.mxu0 0.0
    %1578 = vmatpush1.msra.mxu0 %v633
    %1579 = vmatprep.subr.mxu0 0.0
    %1580 = vmatpush2.msra.mxu0 0.0
    %1581 = vmatprep.subr.mxu0 0.0
    %1582 = vmatpush2.msra.mxu0 0.0
    %1583 = vmatprep.subr.mxu0 0.0
    %1584 = vmatpush2.msra.mxu0 0.0
    %1585 = vmatprep.subr.mxu0 0.0
    %1586 = vmatpush2.msra.mxu0 0.0
    %1587 = vmatprep.subr.mxu0 0.0
    %1588 = vmatpush2.msra.mxu0 0.0
    %1589 = vmatprep.subr.mxu0 0.0
    %1590 = vmatpush2.msra.mxu0 0.0
    %1591 = vmatprep.subr.mxu0 0.0
    %1592 = vmatpush2.msra.mxu0 0.0
    %1593 = vmatprep.subr.mxu0 0.0
    %1594 = vmatpush2.msra.mxu0 0.0
    %1595 = vmatprep.subr.mxu0 0.0
    %1596 = vmatpush2.msra.mxu0 0.0
    %1597 = vmatprep.subr.mxu0 0.0
    %1598 = vmatpush2.msra.mxu0 0.0
    %1599 = vmatprep.subr.mxu0 0.0
    %1600 = vmatpush2.msra.mxu0 0.0
    %1601 = vmatprep.subr.mxu0 0.0
    %1602 = vmatpush2.msra.mxu0 0.0
    %1603 = vmatprep.subr.mxu0 0.0
    %1604 = vmatpush2.msra.mxu0 0.0
    %1605 = vmatprep.subr.mxu0 0.0
    %1606 = vmatpush2.msra.mxu0 0.0
    %1607 = vmatprep.subr.mxu0 0.0
    %1608 = vmatpush2.msra.mxu0 0.0
    %1609 = vmatprep.subr.mxu0 0.0
    %1610 = vmatpush2.msra.mxu0 0.0
    %1611 = vmatprep.mubr.f32.mxu0 0.0
    %1612 = vmatmul.mubr.f32.gmra.mxu0 %v1545
    %v1613 = vpop.f32.mrf.mxu0
    %v1614 = vadd.f32 0.0, %v1613
    %v1615 = vpop.f32.mrf.mxu0
    %1616 = vdwg.mxu0
    %v1618 = vsel %vm1033, %v1393, 0
    %1620 = vmatprep.subr.mxu0 0.0
    %1621 = vmatpush1.msra.mxu0 0.0
    %1622 = vmatprep.subr.mxu0 0.0
    %1623 = vmatpush1.msra.mxu0 0.0
    %1624 = vmatprep.subr.mxu0 0.0
    %1625 = vmatpush1.msra.mxu0 0.0
    %1626 = vmatprep.subr.mxu0 0.0
    %1627 = vmatpush1.msra.mxu0 0.0
    %1628 = vmatprep.subr.mxu0 0.0
    %1629 = vmatpush1.msra.mxu0 0.0
    %1630 = vmatprep.subr.mxu0 0.0
    %1631 = vmatpush1.msra.mxu0 0.0
    %1632 = vmatprep.subr.mxu0 0.0
    %1633 = vmatpush1.msra.mxu0 0.0
    %1634 = vmatprep.subr.mxu0 0.0
    %1635 = vmatpush1.msra.mxu0 0.0
    %1636 = vmatprep.subr.mxu0 0.0
    %1637 = vmatpush1.msra.mxu0 0.0
    %1638 = vmatprep.subr.mxu0 0.0
    %1639 = vmatpush1.msra.mxu0 0.0
    %1640 = vmatprep.subr.mxu0 0.0
    %1641 = vmatpush1.msra.mxu0 0.0
    %1642 = vmatprep.subr.mxu0 0.0
    %1643 = vmatpush1.msra.mxu0 0.0
    %1644 = vmatprep.subr.mxu0 0.0
    %1645 = vmatpush1.msra.mxu0 0.0
    %1646 = vmatprep.subr.mxu0 0.0
    %1647 = vmatpush1.msra.mxu0 0.0
    %1648 = vmatprep.subr.mxu0 0.0
    %1649 = vmatpush1.msra.mxu0 0.0
    %1650 = vmatprep.subr.mxu0 0.0
    %1651 = vmatpush1.msra.mxu0 %v703
    %1652 = vmatprep.subr.mxu0 0.0
    %1653 = vmatpush2.msra.mxu0 0.0
    %1654 = vmatprep.subr.mxu0 0.0
    %1655 = vmatpush2.msra.mxu0 0.0
    %1656 = vmatprep.subr.mxu0 0.0
    %1657 = vmatpush2.msra.mxu0 0.0
    %1658 = vmatprep.subr.mxu0 0.0
    %1659 = vmatpush2.msra.mxu0 0.0
    %1660 = vmatprep.subr.mxu0 0.0
    %1661 = vmatpush2.msra.mxu0 0.0
    %1662 = vmatprep.subr.mxu0 0.0
    %1663 = vmatpush2.msra.mxu0 0.0
    %1664 = vmatprep.subr.mxu0 0.0
    %1665 = vmatpush2.msra.mxu0 0.0
    %1666 = vmatprep.subr.mxu0 0.0
    %1667 = vmatpush2.msra.mxu0 0.0
    %1668 = vmatprep.subr.mxu0 0.0
    %1669 = vmatpush2.msra.mxu0 0.0
    %1670 = vmatprep.subr.mxu0 0.0
    %1671 = vmatpush2.msra.mxu0 0.0
    %1672 = vmatprep.subr.mxu0 0.0
    %1673 = vmatpush2.msra.mxu0 0.0
    %1674 = vmatprep.subr.mxu0 0.0
    %1675 = vmatpush2.msra.mxu0 0.0
    %1676 = vmatprep.subr.mxu0 0.0
    %1677 = vmatpush2.msra.mxu0 0.0
    %1678 = vmatprep.subr.mxu0 0.0
    %1679 = vmatpush2.msra.mxu0 0.0
    %1680 = vmatprep.subr.mxu0 0.0
    %1681 = vmatpush2.msra.mxu0 0.0
    %1682 = vmatprep.subr.mxu0 0.0
    %1683 = vmatpush2.msra.mxu0 0.0
    %1684 = vmatprep.mubr.f32.mxu0 0.0
    %1685 = vmatmul.mubr.f32.gmra.mxu0 %v1618
    %v1686 = vpop.f32.mrf.mxu0
    %v1687 = vadd.f32 0.0, %v1686
    %v1688 = vpop.f32.mrf.mxu0
    %1689 = vdwg.mxu0
    %v1690 = vld [vmem:[%s9] sm:$0xff]
    %v1691 = vld [vmem:[%s9 + $0x8] sm:$0xff]
    %v1692 = vld [vmem:[%s9 + $0x10] sm:$0xff]
    %v1693 = vld [vmem:[%s9 + $0x18] sm:$0xff]
    %v1695 = vsel %vm1033, %v1468, 0
    %1697 = vmatprep.subr.mxu0 0.0
    %1698 = vmatpush1.msra.mxu0 0.0
    %1699 = vmatprep.subr.mxu0 0.0
    %1700 = vmatpush1.msra.mxu0 0.0
    %1701 = vmatprep.subr.mxu0 0.0
    %1702 = vmatpush1.msra.mxu0 0.0
    %1703 = vmatprep.subr.mxu0 0.0
    %1704 = vmatpush1.msra.mxu0 0.0
    %1705 = vmatprep.subr.mxu0 0.0
    %1706 = vmatpush1.msra.mxu0 0.0
    %1707 = vmatprep.subr.mxu0 0.0
    %1708 = vmatpush1.msra.mxu0 0.0
    %1709 = vmatprep.subr.mxu0 0.0
    %1710 = vmatpush1.msra.mxu0 0.0
    %1711 = vmatprep.subr.mxu0 0.0
    %1712 = vmatpush1.msra.mxu0 0.0
    %1713 = vmatprep.subr.mxu0 0.0
    %1714 = vmatpush1.msra.mxu0 0.0
    %1715 = vmatprep.subr.mxu0 0.0
    %1716 = vmatpush1.msra.mxu0 0.0
    %1717 = vmatprep.subr.mxu0 0.0
    %1718 = vmatpush1.msra.mxu0 0.0
    %1719 = vmatprep.subr.mxu0 0.0
    %1720 = vmatpush1.msra.mxu0 0.0
    %1721 = vmatprep.subr.mxu0 0.0
    %1722 = vmatpush1.msra.mxu0 0.0
    %1723 = vmatprep.subr.mxu0 0.0
    %1724 = vmatpush1.msra.mxu0 0.0
    %1725 = vmatprep.subr.mxu0 0.0
    %1726 = vmatpush1.msra.mxu0 0.0
    %1727 = vmatprep.subr.mxu0 0.0
    %1728 = vmatpush1.msra.mxu0 %v1690
    %1729 = vmatprep.subr.mxu0 0.0
    %1730 = vmatpush2.msra.mxu0 0.0
    %1731 = vmatprep.subr.mxu0 0.0
    %1732 = vmatpush2.msra.mxu0 0.0
    %1733 = vmatprep.subr.mxu0 0.0
    %1734 = vmatpush2.msra.mxu0 0.0
    %1735 = vmatprep.subr.mxu0 0.0
    %1736 = vmatpush2.msra.mxu0 0.0
    %1737 = vmatprep.subr.mxu0 0.0
    %1738 = vmatpush2.msra.mxu0 0.0
    %1739 = vmatprep.subr.mxu0 0.0
    %1740 = vmatpush2.msra.mxu0 0.0
    %1741 = vmatprep.subr.mxu0 0.0
    %1742 = vmatpush2.msra.mxu0 0.0
    %1743 = vmatprep.subr.mxu0 0.0
    %1744 = vmatpush2.msra.mxu0 0.0
    %1745 = vmatprep.subr.mxu0 0.0
    %1746 = vmatpush2.msra.mxu0 0.0
    %1747 = vmatprep.subr.mxu0 0.0
    %1748 = vmatpush2.msra.mxu0 0.0
    %1749 = vmatprep.subr.mxu0 0.0
    %1750 = vmatpush2.msra.mxu0 0.0
    %1751 = vmatprep.subr.mxu0 0.0
    %1752 = vmatpush2.msra.mxu0 0.0
    %1753 = vmatprep.subr.mxu0 0.0
    %1754 = vmatpush2.msra.mxu0 0.0
    %1755 = vmatprep.subr.mxu0 0.0
    %1756 = vmatpush2.msra.mxu0 0.0
    %1757 = vmatprep.subr.mxu0 0.0
    %1758 = vmatpush2.msra.mxu0 0.0
    %1759 = vmatprep.subr.mxu0 0.0
    %1760 = vmatpush2.msra.mxu0 0.0
    %1761 = vmatprep.mubr.f32.mxu0 0.0
    %1762 = vmatmul.mubr.f32.gmra.mxu0 %v1695
    %v1763 = vpop.f32.mrf.mxu0
    %v1764 = vadd.f32 0.0, %v1763
    %v1765 = vpop.f32.mrf.mxu0
    %1766 = vdwg.mxu0
    %v1768 = vsel %vm1033, %v1541, 0
    %1770 = vmatprep.subr.mxu0 0.0
    %1771 = vmatpush1.msra.mxu0 0.0
    %1772 = vmatprep.subr.mxu0 0.0
    %1773 = vmatpush1.msra.mxu0 0.0
    %1774 = vmatprep.subr.mxu0 0.0
    %1775 = vmatpush1.msra.mxu0 0.0
    %1776 = vmatprep.subr.mxu0 0.0
    %1777 = vmatpush1.msra.mxu0 0.0
    %1778 = vmatprep.subr.mxu0 0.0
    %1779 = vmatpush1.msra.mxu0 0.0
    %1780 = vmatprep.subr.mxu0 0.0
    %1781 = vmatpush1.msra.mxu0 0.0
    %1782 = vmatprep.subr.mxu0 0.0
    %1783 = vmatpush1.msra.mxu0 0.0
    %1784 = vmatprep.subr.mxu0 0.0
    %1785 = vmatpush1.msra.mxu0 0.0
    %1786 = vmatprep.subr.mxu0 0.0
    %1787 = vmatpush1.msra.mxu0 0.0
    %1788 = vmatprep.subr.mxu0 0.0
    %1789 = vmatpush1.msra.mxu0 0.0
    %1790 = vmatprep.subr.mxu0 0.0
    %1791 = vmatpush1.msra.mxu0 0.0
    %1792 = vmatprep.subr.mxu0 0.0
    %1793 = vmatpush1.msra.mxu0 0.0
    %1794 = vmatprep.subr.mxu0 0.0
    %1795 = vmatpush1.msra.mxu0 0.0
    %1796 = vmatprep.subr.mxu0 0.0
    %1797 = vmatpush1.msra.mxu0 0.0
    %1798 = vmatprep.subr.mxu0 0.0
    %1799 = vmatpush1.msra.mxu0 0.0
    %1800 = vmatprep.subr.mxu0 0.0
    %1801 = vmatpush1.msra.mxu0 %v1691
    %1802 = vmatprep.subr.mxu0 0.0
    %1803 = vmatpush2.msra.mxu0 0.0
    %1804 = vmatprep.subr.mxu0 0.0
    %1805 = vmatpush2.msra.mxu0 0.0
    %1806 = vmatprep.subr.mxu0 0.0
    %1807 = vmatpush2.msra.mxu0 0.0
    %1808 = vmatprep.subr.mxu0 0.0
    %1809 = vmatpush2.msra.mxu0 0.0
    %1810 = vmatprep.subr.mxu0 0.0
    %1811 = vmatpush2.msra.mxu0 0.0
    %1812 = vmatprep.subr.mxu0 0.0
    %1813 = vmatpush2.msra.mxu0 0.0
    %1814 = vmatprep.subr.mxu0 0.0
    %1815 = vmatpush2.msra.mxu0 0.0
    %1816 = vmatprep.subr.mxu0 0.0
    %1817 = vmatpush2.msra.mxu0 0.0
    %1818 = vmatprep.subr.mxu0 0.0
    %1819 = vmatpush2.msra.mxu0 0.0
    %1820 = vmatprep.subr.mxu0 0.0
    %1821 = vmatpush2.msra.mxu0 0.0
    %1822 = vmatprep.subr.mxu0 0.0
    %1823 = vmatpush2.msra.mxu0 0.0
    %1824 = vmatprep.subr.mxu0 0.0
    %1825 = vmatpush2.msra.mxu0 0.0
    %1826 = vmatprep.subr.mxu0 0.0
    %1827 = vmatpush2.msra.mxu0 0.0
    %1828 = vmatprep.subr.mxu0 0.0
    %1829 = vmatpush2.msra.mxu0 0.0
    %1830 = vmatprep.subr.mxu0 0.0
    %1831 = vmatpush2.msra.mxu0 0.0
    %1832 = vmatprep.subr.mxu0 0.0
    %1833 = vmatpush2.msra.mxu0 0.0
    %1834 = vmatprep.mubr.f32.mxu0 0.0
    %1835 = vmatmul.mubr.f32.gmra.mxu0 %v1768
    %v1836 = vpop.f32.mrf.mxu0
    %v1837 = vadd.f32 0.0, %v1836
    %v1838 = vpop.f32.mrf.mxu0
    %1839 = vdwg.mxu0
    %v1841 = vsel %vm1033, %v1614, 0
    %1843 = vmatprep.subr.mxu0 0.0
    %1844 = vmatpush1.msra.mxu0 0.0
    %1845 = vmatprep.subr.mxu0 0.0
    %1846 = vmatpush1.msra.mxu0 0.0
    %1847 = vmatprep.subr.mxu0 0.0
    %1848 = vmatpush1.msra.mxu0 0.0
    %1849 = vmatprep.subr.mxu0 0.0
    %1850 = vmatpush1.msra.mxu0 0.0
    %1851 = vmatprep.subr.mxu0 0.0
    %1852 = vmatpush1.msra.mxu0 0.0
    %1853 = vmatprep.subr.mxu0 0.0
    %1854 = vmatpush1.msra.mxu0 0.0
    %1855 = vmatprep.subr.mxu0 0.0
    %1856 = vmatpush1.msra.mxu0 0.0
    %1857 = vmatprep.subr.mxu0 0.0
    %1858 = vmatpush1.msra.mxu0 0.0
    %1859 = vmatprep.subr.mxu0 0.0
    %1860 = vmatpush1.msra.mxu0 0.0
    %1861 = vmatprep.subr.mxu0 0.0
    %1862 = vmatpush1.msra.mxu0 0.0
    %1863 = vmatprep.subr.mxu0 0.0
    %1864 = vmatpush1.msra.mxu0 0.0
    %1865 = vmatprep.subr.mxu0 0.0
    %1866 = vmatpush1.msra.mxu0 0.0
    %1867 = vmatprep.subr.mxu0 0.0
    %1868 = vmatpush1.msra.mxu0 0.0
    %1869 = vmatprep.subr.mxu0 0.0
    %1870 = vmatpush1.msra.mxu0 0.0
    %1871 = vmatprep.subr.mxu0 0.0
    %1872 = vmatpush1.msra.mxu0 0.0
    %1873 = vmatprep.subr.mxu0 0.0
    %1874 = vmatpush1.msra.mxu0 %v1692
    %1875 = vmatprep.subr.mxu0 0.0
    %1876 = vmatpush2.msra.mxu0 0.0
    %1877 = vmatprep.subr.mxu0 0.0
    %1878 = vmatpush2.msra.mxu0 0.0
    %1879 = vmatprep.subr.mxu0 0.0
    %1880 = vmatpush2.msra.mxu0 0.0
    %1881 = vmatprep.subr.mxu0 0.0
    %1882 = vmatpush2.msra.mxu0 0.0
    %1883 = vmatprep.subr.mxu0 0.0
    %1884 = vmatpush2.msra.mxu0 0.0
    %1885 = vmatprep.subr.mxu0 0.0
    %1886 = vmatpush2.msra.mxu0 0.0
    %1887 = vmatprep.subr.mxu0 0.0
    %1888 = vmatpush2.msra.mxu0 0.0
    %1889 = vmatprep.subr.mxu0 0.0
    %1890 = vmatpush2.msra.mxu0 0.0
    %1891 = vmatprep.subr.mxu0 0.0
    %1892 = vmatpush2.msra.mxu0 0.0
    %1893 = vmatprep.subr.mxu0 0.0
    %1894 = vmatpush2.msra.mxu0 0.0
    %1895 = vmatprep.subr.mxu0 0.0
    %1896 = vmatpush2.msra.mxu0 0.0
    %1897 = vmatprep.subr.mxu0 0.0
    %1898 = vmatpush2.msra.mxu0 0.0
    %1899 = vmatprep.subr.mxu0 0.0
    %1900 = vmatpush2.msra.mxu0 0.0
    %1901 = vmatprep.subr.mxu0 0.0
    %1902 = vmatpush2.msra.mxu0 0.0
    %1903 = vmatprep.subr.mxu0 0.0
    %1904 = vmatpush2.msra.mxu0 0.0
    %1905 = vmatprep.subr.mxu0 0.0
    %1906 = vmatpush2.msra.mxu0 0.0
    %1907 = vmatprep.mubr.f32.mxu0 0.0
    %1908 = vmatmul.mubr.f32.gmra.mxu0 %v1841
    %v1909 = vpop.f32.mrf.mxu0
    %v1910 = vadd.f32 0.0, %v1909
    %v1911 = vpop.f32.mrf.mxu0
    %1912 = vdwg.mxu0
    %v1914 = vsel %vm1033, %v1687, 0
    %1916 = vmatprep.subr.mxu0 0.0
    %1917 = vmatpush1.msra.mxu0 0.0
    %1918 = vmatprep.subr.mxu0 0.0
    %1919 = vmatpush1.msra.mxu0 0.0
    %1920 = vmatprep.subr.mxu0 0.0
    %1921 = vmatpush1.msra.mxu0 0.0
    %1922 = vmatprep.subr.mxu0 0.0
    %1923 = vmatpush1.msra.mxu0 0.0
    %1924 = vmatprep.subr.mxu0 0.0
    %1925 = vmatpush1.msra.mxu0 0.0
    %1926 = vmatprep.subr.mxu0 0.0
    %1927 = vmatpush1.msra.mxu0 0.0
    %1928 = vmatprep.subr.mxu0 0.0
    %1929 = vmatpush1.msra.mxu0 0.0
    %1930 = vmatprep.subr.mxu0 0.0
    %1931 = vmatpush1.msra.mxu0 0.0
    %1932 = vmatprep.subr.mxu0 0.0
    %1933 = vmatpush1.msra.mxu0 0.0
    %1934 = vmatprep.subr.mxu0 0.0
    %1935 = vmatpush1.msra.mxu0 0.0
    %1936 = vmatprep.subr.mxu0 0.0
    %1937 = vmatpush1.msra.mxu0 0.0
    %1938 = vmatprep.subr.mxu0 0.0
    %1939 = vmatpush1.msra.mxu0 0.0
    %1940 = vmatprep.subr.mxu0 0.0
    %1941 = vmatpush1.msra.mxu0 0.0
    %1942 = vmatprep.subr.mxu0 0.0
    %1943 = vmatpush1.msra.mxu0 0.0
    %1944 = vmatprep.subr.mxu0 0.0
    %1945 = vmatpush1.msra.mxu0 0.0
    %1946 = vmatprep.subr.mxu0 0.0
    %1947 = vmatpush1.msra.mxu0 %v1693
    %1948 = vmatprep.subr.mxu0 0.0
    %1949 = vmatpush2.msra.mxu0 0.0
    %1950 = vmatprep.subr.mxu0 0.0
    %1951 = vmatpush2.msra.mxu0 0.0
    %1952 = vmatprep.subr.mxu0 0.0
    %1953 = vmatpush2.msra.mxu0 0.0
    %1954 = vmatprep.subr.mxu0 0.0
    %1955 = vmatpush2.msra.mxu0 0.0
    %1956 = vmatprep.subr.mxu0 0.0
    %1957 = vmatpush2.msra.mxu0 0.0
    %1958 = vmatprep.subr.mxu0 0.0
    %1959 = vmatpush2.msra.mxu0 0.0
    %1960 = vmatprep.subr.mxu0 0.0
    %1961 = vmatpush2.msra.mxu0 0.0
    %1962 = vmatprep.subr.mxu0 0.0
    %1963 = vmatpush2.msra.mxu0 0.0
    %1964 = vmatprep.subr.mxu0 0.0
    %1965 = vmatpush2.msra.mxu0 0.0
    %1966 = vmatprep.subr.mxu0 0.0
    %1967 = vmatpush2.msra.mxu0 0.0
    %1968 = vmatprep.subr.mxu0 0.0
    %1969 = vmatpush2.msra.mxu0 0.0
    %1970 = vmatprep.subr.mxu0 0.0
    %1971 = vmatpush2.msra.mxu0 0.0
    %1972 = vmatprep.subr.mxu0 0.0
    %1973 = vmatpush2.msra.mxu0 0.0
    %1974 = vmatprep.subr.mxu0 0.0
    %1975 = vmatpush2.msra.mxu0 0.0
    %1976 = vmatprep.subr.mxu0 0.0
    %1977 = vmatpush2.msra.mxu0 0.0
    %1978 = vmatprep.subr.mxu0 0.0
    %1979 = vmatpush2.msra.mxu0 0.0
    %1980 = vmatprep.mubr.f32.mxu0 0.0
    %1981 = vmatmul.mubr.f32.gmra.mxu0 %v1914
    %v1982 = vpop.f32.mrf.mxu0
    %v1983 = vadd.f32 0.0, %v1982
    %v1984 = vpop.f32.mrf.mxu0
    %1985 = vdwg.mxu0
    %v1986 = vsel %vm95, %v1764, 0.0
    %v1987 = vsel %vm95, %v1837, 0.0
    %v1988 = vadd.f32 %v1986, %v1987
    %v1989 = vsel %vm95, %v1910, 0.0
    %v1990 = vadd.f32 %v1988, %v1989
    %v1991 = vsel %vm95, %v1983, 0.0
    %v1992 = vadd.f32 %v1990, %v1991
    %v1993 = vld [vmem:[%s10] sm:$0x1]
    %v1995 = vlaneseq
    %v1996 = vshrl.u32 %v1995, 7
    %v1997 = vsub.s32 0, %v1996
    %v1998 = vrot.slane %v1993, %v1997
    %v2000 = vadd.f32 %v1992, %v1998
    %v2001 = vadd.f32 %v50, %v2000
    %v2002 = vsel %vm95, %v2001, 0.0
    %2003 = vadd.xlane.f32.xlu0 %v2002
    %v2004 = vpop.xlane.xlu0 %2003
    %v2005 = vrcp.pop 32.0
    %v2006 = vmul.f32 %v2004, %v2005
    %v2007 = vsub.f32 %v2001, %v2006
    %v2008 = vmul.f32 %v2007, %v2007
    %v2009 = vsel %vm95, %v2008, 0.0
    %2010 = vadd.xlane.f32.xlu0 %v2009
    %v2011 = vpop.xlane.xlu0 %2010
    %v2012 = vmul.f32 %v2011, %v2005
    %v2013 = vadd.f32 %v2012, 1e-05
    %v2014 = vrsqrt.pop %v2013
    %v2015 = vmul.f32 %v2007, %v2014
    %v2016 = vld [vmem:[%s11] sm:$0x1]
    %v2018 = vlaneseq
    %v2019 = vshrl.u32 %v2018, 7
    %v2020 = vsub.s32 0, %v2019
    %v2021 = vrot.slane %v2016, %v2020
    %v2023 = vmul.f32 %v2015, %v2021
    %v2024 = vld [vmem:[%s12] sm:$0x1]
    %v2026 = vlaneseq
    %v2027 = vshrl.u32 %v2026, 7
    %v2028 = vsub.s32 0, %v2027
    %v2029 = vrot.slane %v2024, %v2028
    %v2031 = vadd.f32 %v2023, %v2029
    %2032 = vst.msk [vmem:[#allocation2] sm:$0xff] %vm95, %v2031
    // Predicated region
    $region54: #{tpu_custom_call.1} parent=1 // pred_check
      _
    $region55: #{tpu_custom_call.1} parent=1 // pred_check_branch
      %2034 = sbr.rel (0) target = $region57
    $region56: #{tpu_custom_call.1} parent=1 // pred_region
      %s2036 = ssub.s32 128, 128
      %2037 = vsyncadd [#allocation3], %s2036
      %s2039 = sshll.u32 [#allocation2], 4
      %s2040 = int_to_ptr.vmem [resolvable:$true] %s2039
      %2042 = dma.vmem_to_hbm [thread:$0]  %s2040, 128, %s13, [#allocation3]
    $region57: #{tpu_custom_call.1} parent=1 // pred_fallthru
      _
    // Predicated region
    $region58: #{tpu_custom_call.1} parent=1 // pred_check
      _
    $region59: #{tpu_custom_call.1} parent=1 // pred_check_branch
      %2044 = sbr.rel (0) target = $region61
    $region60: #{tpu_custom_call.1} parent=1 // pred_region
      %s2046 = ssub.s32 512, 512
      %2047 = vsyncadd [#allocation5], %s2046
      %s2048 = sshll.u32 [#allocation4], 4
      %s2049 = int_to_ptr.vmem [resolvable:$true] %s2048
      %2054 = dma.vmem_to_hbm [thread:$0]  %s2049, 512, %s14, [#allocation5], 128, 128, 8
    $region61: #{tpu_custom_call.1} parent=1 // pred_fallthru
      _
    // Predicated region
    $region62: #{tpu_custom_call.1} parent=1 // pred_check
      _
    $region63: #{tpu_custom_call.1} parent=1 // pred_check_branch
      %2056 = sbr.rel (0) target = $region65
    $region64: #{tpu_custom_call.1} parent=1 // pred_region
      %2057 = dma.done [#allocation3], 128
    $region65: #{tpu_custom_call.1} parent=1 // pred_fallthru
      _
    // Predicated region
    $region66: #{tpu_custom_call.1} parent=1 // pred_check
      _
    $region67: #{tpu_custom_call.1} parent=1 // pred_check_branch
      %2059 = sbr.rel (0) target = $region69
    $region68: #{tpu_custom_call.1} parent=1 // pred_region
      %2060 = dma.done [#allocation5], 512
    $region69: #{tpu_custom_call.1} parent=1 // pred_fallthru
      _
    %2061 = vsyncpa [#allocation3], 1
    %2062 = vsyncpa [#allocation5], 1

</llo_original>
